<compile_context>
chip_gen: v7x
topology: tpu7x:2x2x1
jax: 0.10.0
libtpu: 0.0.40
codegen_flags: <defaults>
</compile_context>

<pallas_src>
import functools
import numpy as np

import jax
import jax.numpy as jnp
from jax.experimental import pallas as pl
from jax.experimental.pallas import tpu as pltpu

PAD = 0
LN_EPS = 1e-5
NEG_INF = -1000000000.0


# ------------------------------ kernel helpers -------------------------------

def _layer_norm(y, g, b):
    mu = jnp.mean(y, axis=-1, keepdims=True)
    var = jnp.mean(jnp.square(y - mu), axis=-1, keepdims=True)
    return (y - mu) * jax.lax.rsqrt(var + LN_EPS) * g + b


def _pick_tile(n, pref, align):
    """Largest tile <= pref that divides n and is a multiple of align (else n)."""
    if n <= pref or n % align:
        return n
    t = (pref // align) * align
    while t > align and n % t:
        t -= align
    return t if (t > 0 and n % t == 0) else n


# --------------------------- fused layer-stack kernel ------------------------

def _stack_kernel(x_ref, enc_ref, mask_ref, npm_ref,
                  fcw_ref, fcb_ref, ln1g_ref, ln1b_ref,
                  w1_ref, b1_ref, w2_ref, b2_ref, ln2g_ref, ln2b_ref,
                  o_ref, act_ref, merged_ref, *, n_head, n_batch):
    layer = pl.program_id(1)

    @pl.when(layer == 0)
    def _():
        act_ref[...] = x_ref[...]          # initial dec_output tile (emb + pos enc)

    x = act_ref[...]                       # (B*T, D) f32 — rows: batch-major within tile
    madd = mask_ref[...]                   # (B, Ls) additive src-pad mask (0 / -1e9)
    npm = npm_ref[...]                     # (B*T, 1) non-pad mask

    rows, d_model = x.shape
    len_q = rows // n_batch
    len_k = madd.shape[-1]
    d_k = d_model // n_head
    inv_norm = 1.0 / float(d_k) ** 0.5

    # 1/sqrt(d_k) folded into q once (single full-lane VPU pass); bf16 MXU operand.
    xs = (x * inv_norm).astype(jnp.bfloat16)

    # ---- multi-head cross-attention --------------------------------------------
    # Reference bookkeeping: bmm slot i = hp*B + bp uses q/k/v of (b=i//H, h=i%H),
    # mask row i%B == bp, and lands in merged[rows of bp, lanes hp*d_k:(hp+1)*d_k].
    for bp in range(n_batch):
        madd_b = madd[bp:bp + 1, :]                      # (1, Ls), broadcast over T rows
        for hp in range(n_head):
            i = hp * n_batch + bp
            b, h = i // n_head, i % n_head
            q = xs[b * len_q:(b + 1) * len_q, h * d_k:(h + 1) * d_k]        # (T, d_k)
            kv = enc_ref[b * len_k:(b + 1) * len_k, h * d_k:(h + 1) * d_k]  # (Ls, d_k) bf16
            s = jax.lax.dot_general(q, kv, (((1,), (1,)), ((), ())),
                                    preferred_element_type=jnp.float32)     # (T, Ls)
            s = s + madd_b
            s_max = jnp.max(s, axis=-1, keepdims=True)
            e = jnp.exp(s - s_max)
            p = e * pl.reciprocal(jnp.sum(e, axis=-1, keepdims=True), approx=True)
            o = jnp.dot(p.astype(jnp.bfloat16), kv,
                        preferred_element_type=jnp.float32)                 # (T, d_k)
            merged_ref[bp * len_q:(bp + 1) * len_q,
                       hp * d_k:(hp + 1) * d_k] = o       # head merge via static-offset store

    # one contraction-D matmul for head merge + output projection
    proj = jnp.dot(merged_ref[...].astype(jnp.bfloat16), fcw_ref[0],
                   preferred_element_type=jnp.float32)                      # (B*T, D)

    # projection bias + residual + LayerNorm, then non-pad masking
    a1 = _layer_norm(proj + fcb_ref[0] + x, ln1g_ref[0], ln1b_ref[0]) * npm

    # position-wise feed-forward (Conv1d k=1 == row-wise matmul) + residual + LN + mask
    h1 = jnp.maximum(
        jnp.dot(a1.astype(jnp.bfloat16), w1_ref[0],
                preferred_element_type=jnp.float32) + b1_ref[0], 0.0)
    y2 = jnp.dot(h1.astype(jnp.bfloat16), w2_ref[0],
                 preferred_element_type=jnp.float32) + b2_ref[0] + a1
    a2 = _layer_norm(y2, ln2g_ref[0], ln2b_ref[0]) * npm

    act_ref[...] = a2                      # carry to the next layer

    @pl.when(layer == pl.num_programs(1) - 1)
    def _():
        o_ref[...] = a2                    # last-layer activation out (vocab proj is separate)


# ---------------------------- vocab projection kernel ------------------------

def _vocab_proj_kernel(a_ref, w_ref, o_ref):
    o_ref[...] = jnp.dot(a_ref[...].astype(jnp.bfloat16), w_ref[...],
                         preferred_element_type=jnp.float32)


# --------------------------- model glue (plain JAX) --------------------------

def decoder_forward(params, tgt_seq, encoder_output, src_seq, n_head, tile_t=128):
    Lt, B = tgt_seq.shape
    Ls = src_seq.shape[0]
    D = params["emb"].shape[1]
    V = params["fc_w"].shape[1]
    n_layers = params["fcw"].shape[0]
    Hi = params["w1"].shape[2]

    # row tile over query positions (all batches per tile => tiling is exact)
    if tile_t <= 0 or tile_t >= Lt or tile_t % 8 or Lt % tile_t:
        tile_t = Lt
    n_tiles = Lt // tile_t
    bt = B * tile_t

    # masks: compressed (B, Ls) additive src-pad mask; (.., 1) non-pad target mask.
    # (The reference layer's self-attention output is discarded, so the causal/self
    # mask and that whole branch are dead code and are not computed.)
    madd = jnp.where(jnp.transpose(src_seq == PAD), NEG_INF, 0.0).astype(jnp.float32)
    npm0 = jnp.transpose(tgt_seq != PAD).astype(jnp.float32)                 # (B, Lt)
    npm_t = npm0.reshape(B, n_tiles, tile_t).transpose(1, 0, 2).reshape(n_tiles, bt, 1)

    pos_ids = jnp.where(tgt_seq != PAD,
                        jnp.arange(Lt, dtype=jnp.int32)[:, None] + 1, 0)
    # TODO(synk): embedding / positional-table gathers stay as XLA ops (no clean
    # tiny-Pallas gather); everything after them runs in Pallas.
    dec0 = params["emb"][tgt_seq] + params["pos_table"][pos_ids]             # (Lt, B, D)
    x0 = jnp.transpose(dec0, (1, 0, 2))                                      # (B, Lt, D)
    xt = x0.reshape(B, n_tiles, tile_t, D).transpose(1, 0, 2, 3).reshape(n_tiles, bt, D)
    enc = jnp.transpose(encoder_output, (1, 0, 2)).reshape(B * Ls, D).astype(jnp.bfloat16)

    kernel = functools.partial(_stack_kernel, n_head=n_head, n_batch=B)

    def row_tile(last):
        return pl.BlockSpec((None, bt, last), lambda i, l: (i, 0, 0))

    def whole(shape):
        n = len(shape)
        return pl.BlockSpec(shape, lambda i, l, n=n: (0,) * n)

    def per_layer(shape):
        n = len(shape)
        return pl.BlockSpec((1,) + shape, lambda i, l, n=n: (l,) + (0,) * n)

    # explicit VMEM budget: per-layer weights (double-buffered), activation-sized
    # tiles (x, out, 2 scratches), grid-invariant enc/mask — with generous slack.
    per_layer_bytes = (D * D + D * Hi + Hi * D) * 2 + (6 * D + Hi) * 4
    vmem_limit = int((8 << 20)
                     + 4 * 2 * per_layer_bytes
                     + 8 * bt * D * 4
                     + 2 * (B * Ls * D * 2 + B * Ls * 4 + 2 * bt * 4))
    vmem_limit = min(vmem_limit, 64 << 20)

    act = pl.pallas_call(
        kernel,
        out_shape=jax.ShapeDtypeStruct((n_tiles, bt, D), jnp.float32),
        grid=(n_tiles, n_layers),
        in_specs=[
            row_tile(D),                 # x (initial dec_output), per row tile
            whole((B * Ls, D)),          # encoder memory (K == V), grid-invariant
            whole((B, Ls)),              # compressed additive src pad mask
            row_tile(1),                 # non-pad mask, per row tile
            per_layer((D, D)),           # attn out-proj weight (bf16)
            per_layer((1, D)),           # attn out-proj bias
            per_layer((1, D)),           # attn LN gamma
            per_layer((1, D)),           # attn LN beta
            per_layer((D, Hi)),          # ffn w1 (bf16)
            per_layer((1, Hi)),          # ffn b1
            per_layer((Hi, D)),          # ffn w2 (bf16)
            per_layer((1, D)),           # ffn b2
            per_layer((1, D)),           # ffn LN gamma
            per_layer((1, D)),           # ffn LN beta
        ],
        out_specs=row_tile(D),
        scratch_shapes=[pltpu.VMEM((bt, D), jnp.float32),    # carried activation tile
                        pltpu.VMEM((bt, D), jnp.float32)],   # merged attention heads
        compiler_params=pltpu.CompilerParams(
            dimension_semantics=("parallel", "arbitrary"),   # row tiles ||, layers seq
            vmem_limit_bytes=vmem_limit),
    )(xt, enc, madd, npm_t,
      params["fcw"], params["fcb"], params["ln1_g"], params["ln1_b"],
      params["w1"], params["b1"], params["w2"], params["b2"],
      params["ln2_g"], params["ln2_b"])

    # back to batch-major rows, then the separate (parallel-tiled) vocab projection
    act2 = act.reshape(n_tiles, B, tile_t, D).transpose(1, 0, 2, 3).reshape(B * Lt, D)

    R = B * Lt
    tr = _pick_tile(R, 256, 8)
    tv = _pick_tile(V, 512, 128)
    logits = pl.pallas_call(
        _vocab_proj_kernel,
        out_shape=jax.ShapeDtypeStruct((R, V), jnp.float32),
        grid=(R // tr, V // tv),
        in_specs=[pl.BlockSpec((tr, D), lambda i, j: (i, 0)),
                  pl.BlockSpec((D, tv), lambda i, j: (0, j))],
        out_specs=pl.BlockSpec((tr, tv), lambda i, j: (i, j)),
        compiler_params=pltpu.CompilerParams(
            dimension_semantics=("parallel", "parallel")),
    )(act2, params["fc_w"])

    return jnp.transpose(logits.reshape(B, Lt, V), (1, 0, 2))               # (Lt, B, V)


# --------------------------- parameter construction --------------------------

def sinusoid_table(n_position, d_hid):
    pos = np.arange(n_position)[:, None].astype(np.float64)
    j = np.arange(d_hid)[None, :]
    table = pos / np.power(10000.0, 2 * (j // 2) / d_hid)
    table[:, 0::2] = np.sin(table[:, 0::2])
    table[:, 1::2] = np.cos(table[:, 1::2])
    table[PAD] = 0.0
    return jnp.asarray(table, dtype=jnp.float32)


def make_params(key, vocab, d_model, d_inner, n_layers, n_position):
    def nrm(k, shape, scale=0.05, dtype=jnp.float32):
        return (scale * jax.random.normal(k, shape)).astype(dtype)

    keys = jax.random.split(key, 6)
    # Per-layer tensors are stacked along a leading layer axis so the fused kernel
    # can index them with the grid's layer coordinate.  Weights feeding the MXU are
    # stored in bf16; biases / LayerNorm params stay f32.  The reference layer's
    # self-attention parameters are omitted (its output never reaches the output).
    return {
        "emb": nrm(keys[0], (vocab, d_model), 1.0),
        "pos_table": sinusoid_table(n_position, d_model),
        "fc_w": nrm(keys[1], (d_model, vocab), dtype=jnp.bfloat16),
        "fcw": nrm(keys[2], (n_layers, d_model, d_model), dtype=jnp.bfloat16),
        "fcb": nrm(keys[3], (n_layers, 1, d_model)),
        "ln1_g": jnp.ones((n_layers, 1, d_model), jnp.float32),
        "ln1_b": jnp.zeros((n_layers, 1, d_model), jnp.float32),
        "w1": nrm(keys[4], (n_layers, d_model, d_inner), dtype=jnp.bfloat16),
        "b1": jnp.zeros((n_layers, 1, d_inner), jnp.float32),
        "w2": nrm(keys[5], (n_layers, d_inner, d_model), dtype=jnp.bfloat16),
        "b2": jnp.zeros((n_layers, 1, d_model), jnp.float32),
        "ln2_g": jnp.ones((n_layers, 1, d_model), jnp.float32),
        "ln2_b": jnp.zeros((n_layers, 1, d_model), jnp.float32),
    }


# --------------------------------- main ---------------------------------------

if __name__ == "__main__":
    B, Lt, Ls = 2, 16, 8
    d_model, n_head, d_inner, vocab, n_layers = 32, 4, 64, 64, 2
    n_position = max(Lt, Ls) + 3

    key = jax.random.PRNGKey(0)
    k_tgt, k_src, k_enc, k_par = jax.random.split(key, 4)

    tgt_seq = jax.random.randint(k_tgt, (Lt, B), 1, vocab, dtype=jnp.int32)
    src_seq = jax.random.randint(k_src, (Ls, B), 1, vocab, dtype=jnp.int32)
    # introduce some PAD tokens (trailing positions of batch element 1)
    tgt_seq = tgt_seq.at[12:, 1].set(PAD)
    src_seq = src_seq.at[5:, 1].set(PAD)
    encoder_output = (0.1 * jax.random.normal(k_enc, (Ls, B, d_model))).astype(jnp.float32)

    params = make_params(k_par, vocab, d_model, d_inner, n_layers, n_position)

    fwd = jax.jit(functools.partial(decoder_forward, n_head=n_head, tile_t=8))
    out = jax.block_until_ready(fwd(params, tgt_seq, encoder_output, src_seq))

    assert out.shape == (Lt, B, vocab), out.shape
    assert bool(jnp.all(jnp.isfinite(out)))
    print("KERNEL_OK")
</pallas_src>

<mosaic_0001>
module attributes {stable_mosaic.version = 11 : i64} {
  func.func @_vocab_proj_kernel(%arg0: i32, %arg1: i32, %arg2: memref<32x32xf32, #tpu.memory_space<vmem>>, %arg3: memref<32x64xbf16, #tpu.memory_space<vmem>>, %arg4: memref<32x64xf32, #tpu.memory_space<vmem>>) attributes {dimension_semantics = [#tpu.dimension_semantics<parallel>, #tpu.dimension_semantics<parallel>], iteration_bounds = array<i64: 1, 1>, scalar_prefetch = 0 : i64, scratch_operands = 0 : i64, tpu.core_type = #tpu.core_type<tc>, window_params = [{transform_indices = @transform_0, window_bounds = array<i64: 32, 32>}, {transform_indices = @transform_1, window_bounds = array<i64: 32, 64>}, {transform_indices = @transform_2, window_bounds = array<i64: 32, 64>}]} {
    %c0 = arith.constant 0 : index
    %c0_0 = arith.constant 0 : index
    %0 = vector.load %arg2[%c0, %c0_0] : memref<32x32xf32, #tpu.memory_space<vmem>>, vector<32x32xf32>
    %1 = arith.truncf %0 : vector<32x32xf32> to vector<32x32xbf16>
    %c0_1 = arith.constant 0 : index
    %c0_2 = arith.constant 0 : index
    %2 = vector.load %arg3[%c0_1, %c0_2] : memref<32x64xbf16, #tpu.memory_space<vmem>>, vector<32x64xbf16>
    %cst = arith.constant dense<0.000000e+00> : vector<32x64xf32>
    %3 = tpu.matmul %1, %2, %cst {dimension_numbers = #tpu.dot_dimension_numbers<[1], [0], [0], [1], [0, 0, 1, 1], [], []>} : vector<32x32xbf16>, vector<32x64xbf16>, vector<32x64xf32> -> vector<32x64xf32>
    %c0_3 = arith.constant 0 : index
    %c0_4 = arith.constant 0 : index
    %4 = vector.load %arg4[%c0_3, %c0_4] : memref<32x64xf32, #tpu.memory_space<vmem>>, vector<32x64xf32>
    tpu.vector_store %arg4[%c0_3, %c0_4], %3 {strides = array<i32>} : memref<32x64xf32, #tpu.memory_space<vmem>>, vector<32x64xf32>,
    return
  }
  func.func @transform_0(%arg0: i32, %arg1: i32) -> (i32, i32) {
    %c0_i32 = arith.constant 0 : i32
    %c0_i32_0 = arith.constant 0 : i32
    return %arg0, %c0_i32 : i32, i32
  }
  func.func @transform_1(%arg0: i32, %arg1: i32) -> (i32, i32) {
    %c0_i32 = arith.constant 0 : i32
    %c0_i32_0 = arith.constant 0 : i32
    return %c0_i32, %arg1 : i32, i32
  }
  func.func @transform_2(%arg0: i32, %arg1: i32) -> (i32, i32) {
    %c0_i32 = arith.constant 0 : i32
    return %arg0, %arg1 : i32, i32
  }
}

module attributes {stable_mosaic.version = 11 : i64} {
  func.func @_stack_kernel(%arg0: i32, %arg1: i32, %arg2: memref<1x16x32xf32, #tpu.memory_space<vmem>>, %arg3: memref<16x32xbf16, #tpu.memory_space<vmem>>, %arg4: memref<2x8xf32, #tpu.memory_space<vmem>>, %arg5: memref<1x16x1xf32, #tpu.memory_space<vmem>>, %arg6: memref<1x32x32xbf16, #tpu.memory_space<vmem>>, %arg7: memref<1x1x32xf32, #tpu.memory_space<vmem>>, %arg8: memref<1x1x32xf32, #tpu.memory_space<vmem>>, %arg9: memref<1x1x32xf32, #tpu.memory_space<vmem>>, %arg10: memref<1x32x64xbf16, #tpu.memory_space<vmem>>, %arg11: memref<1x1x64xf32, #tpu.memory_space<vmem>>, %arg12: memref<1x64x32xbf16, #tpu.memory_space<vmem>>, %arg13: memref<1x1x32xf32, #tpu.memory_space<vmem>>, %arg14: memref<1x1x32xf32, #tpu.memory_space<vmem>>, %arg15: memref<1x1x32xf32, #tpu.memory_space<vmem>>, %arg16: memref<1x16x32xf32, #tpu.memory_space<vmem>>, %arg17: memref<16x32xf32, #tpu.memory_space<vmem>>, %arg18: memref<16x32xf32, #tpu.memory_space<vmem>>) attributes {dimension_semantics = [#tpu.dimension_semantics<parallel>, #tpu.dimension_semantics<arbitrary>], iteration_bounds = array<i64: 2, 2>, scalar_prefetch = 0 : i64, scratch_operands = 2 : i64, tpu.core_type = #tpu.core_type<tc>, window_params = [{transform_indices = @transform_0, window_bounds = array<i64: 1, 16, 32>}, {pipeline_mode = #tpu.pipeline_mode<synchronous>, transform_indices = @transform_1, window_bounds = array<i64: 16, 32>}, {pipeline_mode = #tpu.pipeline_mode<synchronous>, transform_indices = @transform_2, window_bounds = array<i64: 2, 8>}, {transform_indices = @transform_3, window_bounds = array<i64: 1, 16, 1>}, {transform_indices = @transform_4, window_bounds = array<i64: 1, 32, 32>}, {transform_indices = @transform_5, window_bounds = array<i64: 1, 1, 32>}, {transform_indices = @transform_6, window_bounds = array<i64: 1, 1, 32>}, {transform_indices = @transform_7, window_bounds = array<i64: 1, 1, 32>}, {transform_indices = @transform_8, window_bounds = array<i64: 1, 32, 64>}, {transform_indices = @transform_9, window_bounds = array<i64: 1, 1, 64>}, {transform_indices = @transform_10, window_bounds = array<i64: 1, 64, 32>}, {transform_indices = @transform_11, window_bounds = array<i64: 1, 1, 32>}, {transform_indices = @transform_12, window_bounds = array<i64: 1, 1, 32>}, {transform_indices = @transform_13, window_bounds = array<i64: 1, 1, 32>}, {transform_indices = @transform_14, window_bounds = array<i64: 1, 16, 32>}]} {
    %c0_i32 = arith.constant 0 : i32
    %0 = arith.cmpi eq, %arg1, %c0_i32 : i32
    %1 = arith.extui %0 : i1 to i32
    %c0_i32_0 = arith.constant 0 : i32
    %2 = arith.cmpi ne, %1, %c0_i32_0 : i32
    scf.if %2 {
      %c0_117 = arith.constant 0 : index
      %c0_118 = arith.constant 0 : index
      %c0_119 = arith.constant 0 : index
      %245 = vector.load %arg2[%c0_117, %c0_118, %c0_119] : memref<1x16x32xf32, #tpu.memory_space<vmem>>, vector<1x16x32xf32>
      %246 = vector.shape_cast %245 : vector<1x16x32xf32> to vector<16x32xf32>
      %c0_120 = arith.constant 0 : index
      %c0_121 = arith.constant 0 : index
      %247 = vector.load %arg17[%c0_120, %c0_121] : memref<16x32xf32, #tpu.memory_space<vmem>>, vector<16x32xf32>
      tpu.vector_store %arg17[%c0_120, %c0_121], %246 {strides = array<i32>} : memref<16x32xf32, #tpu.memory_space<vmem>>, vector<16x32xf32>,
    } else {
    }
    %c0 = arith.constant 0 : index
    %c0_1 = arith.constant 0 : index
    %3 = vector.load %arg17[%c0, %c0_1] : memref<16x32xf32, #tpu.memory_space<vmem>>, vector<16x32xf32>
    %c0_2 = arith.constant 0 : index
    %c0_3 = arith.constant 0 : index
    %4 = vector.load %arg4[%c0_2, %c0_3] : memref<2x8xf32, #tpu.memory_space<vmem>>, vector<2x8xf32>
    %c0_4 = arith.constant 0 : index
    %c0_5 = arith.constant 0 : index
    %c0_6 = arith.constant 0 : index
    %5 = vector.load %arg5[%c0_4, %c0_5, %c0_6] : memref<1x16x1xf32, #tpu.memory_space<vmem>>, vector<1x16x1xf32>
    %6 = vector.shape_cast %5 : vector<1x16x1xf32> to vector<16x1xf32>
    %cst = arith.constant 0.353553385 : f32
    %7 = vector.broadcast %cst : f32 to vector<16x32xf32>
    %8 = arith.mulf %3, %7 : vector<16x32xf32>
    %9 = arith.truncf %8 : vector<16x32xf32> to vector<16x32xbf16>
    %10 = vector.extract_strided_slice %4 {offsets = [0, 0], sizes = [1, 8], strides = [1, 1]} : vector<2x8xf32> to vector<1x8xf32>
    %11 = vector.extract_strided_slice %9 {offsets = [0, 0], sizes = [8, 8], strides = [1, 1]} : vector<16x32xbf16> to vector<8x8xbf16>
    %c0_7 = arith.constant 0 : index
    %c0_8 = arith.constant 0 : index
    %12 = vector.load %arg3[%c0_7, %c0_8] : memref<16x32xbf16, #tpu.memory_space<vmem>>, vector<8x8xbf16>
    %cst_9 = arith.constant dense<0.000000e+00> : vector<8x8xf32>
    %13 = tpu.matmul %11, %12, %cst_9 {dimension_numbers = #tpu.dot_dimension_numbers<[1], [1], [0], [0], [0, 0, 1, 0], [], []>} : vector<8x8xbf16>, vector<8x8xbf16>, vector<8x8xf32> -> vector<8x8xf32>
    %14 = vector.broadcast %10 : vector<1x8xf32> to vector<8x8xf32>
    %15 = arith.addf %13, %14 : vector<8x8xf32>
    %cst_10 = arith.constant dense<0xFF800000> : vector<8xf32>
    %16 = vector.multi_reduction <maximumf>, %15, %cst_10 [1] : vector<8x8xf32> to vector<8xf32>
    %17 = vector.shape_cast %16 : vector<8xf32> to vector<8x1xf32>
    %18 = vector.broadcast %17 : vector<8x1xf32> to vector<8x8xf32>
    %19 = arith.subf %15, %18 : vector<8x8xf32>
    %20 = math.exp %19 : vector<8x8xf32>
    %cst_11 = arith.constant dense<0.000000e+00> : vector<8xf32>
    %21 = vector.multi_reduction <add>, %20, %cst_11 [1] : vector<8x8xf32> to vector<8xf32>
    %22 = vector.shape_cast %21 : vector<8xf32> to vector<8x1xf32>
    %23 = tpu.reciprocal %22 {approx = true} : vector<8x1xf32> -> vector<8x1xf32>
    %24 = vector.broadcast %23 : vector<8x1xf32> to vector<8x8xf32>
    %25 = arith.mulf %20, %24 : vector<8x8xf32>
    %26 = arith.truncf %25 : vector<8x8xf32> to vector<8x8xbf16>
    %cst_12 = arith.constant dense<0.000000e+00> : vector<8x8xf32>
    %27 = tpu.matmul %26, %12, %cst_12 {dimension_numbers = #tpu.dot_dimension_numbers<[1], [0], [0], [1], [0, 0, 1, 1], [], []>} : vector<8x8xbf16>, vector<8x8xbf16>, vector<8x8xf32> -> vector<8x8xf32>
    %c0_13 = arith.constant 0 : index
    %c0_14 = arith.constant 0 : index
    %28 = vector.load %arg18[%c0_13, %c0_14] : memref<16x32xf32, #tpu.memory_space<vmem>>, vector<8x8xf32>
    tpu.vector_store %arg18[%c0_13, %c0_14], %27 {strides = array<i32>} : memref<16x32xf32, #tpu.memory_space<vmem>>, vector<8x8xf32>,
    %29 = vector.extract_strided_slice %9 {offsets = [0, 16], sizes = [8, 8], strides = [1, 1]} : vector<16x32xbf16> to vector<8x8xbf16>
    %c0_15 = arith.constant 0 : index
    %c16 = arith.constant 16 : index
    %30 = vector.load %arg3[%c0_15, %c16] : memref<16x32xbf16, #tpu.memory_space<vmem>>, vector<8x8xbf16>
    %cst_16 = arith.constant dense<0.000000e+00> : vector<8x8xf32>
    %31 = tpu.matmul %29, %30, %cst_16 {dimension_numbers = #tpu.dot_dimension_numbers<[1], [1], [0], [0], [0, 0, 1, 0], [], []>} : vector<8x8xbf16>, vector<8x8xbf16>, vector<8x8xf32> -> vector<8x8xf32>
    %32 = vector.broadcast %10 : vector<1x8xf32> to vector<8x8xf32>
    %33 = arith.addf %31, %32 : vector<8x8xf32>
    %cst_17 = arith.constant dense<0xFF800000> : vector<8xf32>
    %34 = vector.multi_reduction <maximumf>, %33, %cst_17 [1] : vector<8x8xf32> to vector<8xf32>
    %35 = vector.shape_cast %34 : vector<8xf32> to vector<8x1xf32>
    %36 = vector.broadcast %35 : vector<8x1xf32> to vector<8x8xf32>
    %37 = arith.subf %33, %36 : vector<8x8xf32>
    %38 = math.exp %37 : vector<8x8xf32>
    %cst_18 = arith.constant dense<0.000000e+00> : vector<8xf32>
    %39 = vector.multi_reduction <add>, %38, %cst_18 [1] : vector<8x8xf32> to vector<8xf32>
    %40 = vector.shape_cast %39 : vector<8xf32> to vector<8x1xf32>
    %41 = tpu.reciprocal %40 {approx = true} : vector<8x1xf32> -> vector<8x1xf32>
    %42 = vector.broadcast %41 : vector<8x1xf32> to vector<8x8xf32>
    %43 = arith.mulf %38, %42 : vector<8x8xf32>
    %44 = arith.truncf %43 : vector<8x8xf32> to vector<8x8xbf16>
    %cst_19 = arith.constant dense<0.000000e+00> : vector<8x8xf32>
    %45 = tpu.matmul %44, %30, %cst_19 {dimension_numbers = #tpu.dot_dimension_numbers<[1], [0], [0], [1], [0, 0, 1, 1], [], []>} : vector<8x8xbf16>, vector<8x8xbf16>, vector<8x8xf32> -> vector<8x8xf32>
    %c0_20 = arith.constant 0 : index
    %c8 = arith.constant 8 : index
    %46 = vector.load %arg18[%c0_20, %c8] : memref<16x32xf32, #tpu.memory_space<vmem>>, vector<8x8xf32>
    tpu.vector_store %arg18[%c0_20, %c8], %45 {strides = array<i32>} : memref<16x32xf32, #tpu.memory_space<vmem>>, vector<8x8xf32>,
    %47 = vector.extract_strided_slice %9 {offsets = [8, 0], sizes = [8, 8], strides = [1, 1]} : vector<16x32xbf16> to vector<8x8xbf16>
    %c8_21 = arith.constant 8 : index
    %c0_22 = arith.constant 0 : index
    %48 = vector.load %arg3[%c8_21, %c0_22] : memref<16x32xbf16, #tpu.memory_space<vmem>>, vector<8x8xbf16>
    %cst_23 = arith.constant dense<0.000000e+00> : vector<8x8xf32>
    %49 = tpu.matmul %47, %48, %cst_23 {dimension_numbers = #tpu.dot_dimension_numbers<[1], [1], [0], [0], [0, 0, 1, 0], [], []>} : vector<8x8xbf16>, vector<8x8xbf16>, vector<8x8xf32> -> vector<8x8xf32>
    %50 = vector.broadcast %10 : vector<1x8xf32> to vector<8x8xf32>
    %51 = arith.addf %49, %50 : vector<8x8xf32>
    %cst_24 = arith.constant dense<0xFF800000> : vector<8xf32>
    %52 = vector.multi_reduction <maximumf>, %51, %cst_24 [1] : vector<8x8xf32> to vector<8xf32>
    %53 = vector.shape_cast %52 : vector<8xf32> to vector<8x1xf32>
    %54 = vector.broadcast %53 : vector<8x1xf32> to vector<8x8xf32>
    %55 = arith.subf %51, %54 : vector<8x8xf32>
    %56 = math.exp %55 : vector<8x8xf32>
    %cst_25 = arith.constant dense<0.000000e+00> : vector<8xf32>
    %57 = vector.multi_reduction <add>, %56, %cst_25 [1] : vector<8x8xf32> to vector<8xf32>
    %58 = vector.shape_cast %57 : vector<8xf32> to vector<8x1xf32>
    %59 = tpu.reciprocal %58 {approx = true} : vector<8x1xf32> -> vector<8x1xf32>
    %60 = vector.broadcast %59 : vector<8x1xf32> to vector<8x8xf32>
    %61 = arith.mulf %56, %60 : vector<8x8xf32>
    %62 = arith.truncf %61 : vector<8x8xf32> to vector<8x8xbf16>
    %cst_26 = arith.constant dense<0.000000e+00> : vector<8x8xf32>
    %63 = tpu.matmul %62, %48, %cst_26 {dimension_numbers = #tpu.dot_dimension_numbers<[1], [0], [0], [1], [0, 0, 1, 1], [], []>} : vector<8x8xbf16>, vector<8x8xbf16>, vector<8x8xf32> -> vector<8x8xf32>
    %c0_27 = arith.constant 0 : index
    %c16_28 = arith.constant 16 : index
    %64 = vector.load %arg18[%c0_27, %c16_28] : memref<16x32xf32, #tpu.memory_space<vmem>>, vector<8x8xf32>
    tpu.vector_store %arg18[%c0_27, %c16_28], %63 {strides = array<i32>} : memref<16x32xf32, #tpu.memory_space<vmem>>, vector<8x8xf32>,
    %65 = vector.extract_strided_slice %9 {offsets = [8, 16], sizes = [8, 8], strides = [1, 1]} : vector<16x32xbf16> to vector<8x8xbf16>
    %c8_29 = arith.constant 8 : index
    %c16_30 = arith.constant 16 : index
    %66 = vector.load %arg3[%c8_29, %c16_30] : memref<16x32xbf16, #tpu.memory_space<vmem>>, vector<8x8xbf16>
    %cst_31 = arith.constant dense<0.000000e+00> : vector<8x8xf32>
    %67 = tpu.matmul %65, %66, %cst_31 {dimension_numbers = #tpu.dot_dimension_numbers<[1], [1], [0], [0], [0, 0, 1, 0], [], []>} : vector<8x8xbf16>, vector<8x8xbf16>, vector<8x8xf32> -> vector<8x8xf32>
    %68 = vector.broadcast %10 : vector<1x8xf32> to vector<8x8xf32>
    %69 = arith.addf %67, %68 : vector<8x8xf32>
    %cst_32 = arith.constant dense<0xFF800000> : vector<8xf32>
    %70 = vector.multi_reduction <maximumf>, %69, %cst_32 [1] : vector<8x8xf32> to vector<8xf32>
    %71 = vector.shape_cast %70 : vector<8xf32> to vector<8x1xf32>
    %72 = vector.broadcast %71 : vector<8x1xf32> to vector<8x8xf32>
    %73 = arith.subf %69, %72 : vector<8x8xf32>
    %74 = math.exp %73 : vector<8x8xf32>
    %cst_33 = arith.constant dense<0.000000e+00> : vector<8xf32>
    %75 = vector.multi_reduction <add>, %74, %cst_33 [1] : vector<8x8xf32> to vector<8xf32>
    %76 = vector.shape_cast %75 : vector<8xf32> to vector<8x1xf32>
    %77 = tpu.reciprocal %76 {approx = true} : vector<8x1xf32> -> vector<8x1xf32>
    %78 = vector.broadcast %77 : vector<8x1xf32> to vector<8x8xf32>
    %79 = arith.mulf %74, %78 : vector<8x8xf32>
    %80 = arith.truncf %79 : vector<8x8xf32> to vector<8x8xbf16>
    %cst_34 = arith.constant dense<0.000000e+00> : vector<8x8xf32>
    %81 = tpu.matmul %80, %66, %cst_34 {dimension_numbers = #tpu.dot_dimension_numbers<[1], [0], [0], [1], [0, 0, 1, 1], [], []>} : vector<8x8xbf16>, vector<8x8xbf16>, vector<8x8xf32> -> vector<8x8xf32>
    %c0_35 = arith.constant 0 : index
    %c24 = arith.constant 24 : index
    %82 = vector.load %arg18[%c0_35, %c24] : memref<16x32xf32, #tpu.memory_space<vmem>>, vector<8x8xf32>
    tpu.vector_store %arg18[%c0_35, %c24], %81 {strides = array<i32>} : memref<16x32xf32, #tpu.memory_space<vmem>>, vector<8x8xf32>,
    %83 = vector.extract_strided_slice %4 {offsets = [1, 0], sizes = [1, 8], strides = [1, 1]} : vector<2x8xf32> to vector<1x8xf32>
    %84 = vector.extract_strided_slice %9 {offsets = [0, 8], sizes = [8, 8], strides = [1, 1]} : vector<16x32xbf16> to vector<8x8xbf16>
    %c0_36 = arith.constant 0 : index
    %c8_37 = arith.constant 8 : index
    %85 = vector.load %arg3[%c0_36, %c8_37] : memref<16x32xbf16, #tpu.memory_space<vmem>>, vector<8x8xbf16>
    %cst_38 = arith.constant dense<0.000000e+00> : vector<8x8xf32>
    %86 = tpu.matmul %84, %85, %cst_38 {dimension_numbers = #tpu.dot_dimension_numbers<[1], [1], [0], [0], [0, 0, 1, 0], [], []>} : vector<8x8xbf16>, vector<8x8xbf16>, vector<8x8xf32> -> vector<8x8xf32>
    %87 = vector.broadcast %83 : vector<1x8xf32> to vector<8x8xf32>
    %88 = arith.addf %86, %87 : vector<8x8xf32>
    %cst_39 = arith.constant dense<0xFF800000> : vector<8xf32>
    %89 = vector.multi_reduction <maximumf>, %88, %cst_39 [1] : vector<8x8xf32> to vector<8xf32>
    %90 = vector.shape_cast %89 : vector<8xf32> to vector<8x1xf32>
    %91 = vector.broadcast %90 : vector<8x1xf32> to vector<8x8xf32>
    %92 = arith.subf %88, %91 : vector<8x8xf32>
    %93 = math.exp %92 : vector<8x8xf32>
    %cst_40 = arith.constant dense<0.000000e+00> : vector<8xf32>
    %94 = vector.multi_reduction <add>, %93, %cst_40 [1] : vector<8x8xf32> to vector<8xf32>
    %95 = vector.shape_cast %94 : vector<8xf32> to vector<8x1xf32>
    %96 = tpu.reciprocal %95 {approx = true} : vector<8x1xf32> -> vector<8x1xf32>
    %97 = vector.broadcast %96 : vector<8x1xf32> to vector<8x8xf32>
    %98 = arith.mulf %93, %97 : vector<8x8xf32>
    %99 = arith.truncf %98 : vector<8x8xf32> to vector<8x8xbf16>
    %cst_41 = arith.constant dense<0.000000e+00> : vector<8x8xf32>
    %100 = tpu.matmul %99, %85, %cst_41 {dimension_numbers = #tpu.dot_dimension_numbers<[1], [0], [0], [1], [0, 0, 1, 1], [], []>} : vector<8x8xbf16>, vector<8x8xbf16>, vector<8x8xf32> -> vector<8x8xf32>
    %c8_42 = arith.constant 8 : index
    %c0_43 = arith.constant 0 : index
    %101 = vector.load %arg18[%c8_42, %c0_43] : memref<16x32xf32, #tpu.memory_space<vmem>>, vector<8x8xf32>
    tpu.vector_store %arg18[%c8_42, %c0_43], %100 {strides = array<i32>} : memref<16x32xf32, #tpu.memory_space<vmem>>, vector<8x8xf32>,
    %102 = vector.extract_strided_slice %9 {offsets = [0, 24], sizes = [8, 8], strides = [1, 1]} : vector<16x32xbf16> to vector<8x8xbf16>
    %c0_44 = arith.constant 0 : index
    %c24_45 = arith.constant 24 : index
    %103 = vector.load %arg3[%c0_44, %c24_45] : memref<16x32xbf16, #tpu.memory_space<vmem>>, vector<8x8xbf16>
    %cst_46 = arith.constant dense<0.000000e+00> : vector<8x8xf32>
    %104 = tpu.matmul %102, %103, %cst_46 {dimension_numbers = #tpu.dot_dimension_numbers<[1], [1], [0], [0], [0, 0, 1, 0], [], []>} : vector<8x8xbf16>, vector<8x8xbf16>, vector<8x8xf32> -> vector<8x8xf32>
    %105 = vector.broadcast %83 : vector<1x8xf32> to vector<8x8xf32>
    %106 = arith.addf %104, %105 : vector<8x8xf32>
    %cst_47 = arith.constant dense<0xFF800000> : vector<8xf32>
    %107 = vector.multi_reduction <maximumf>, %106, %cst_47 [1] : vector<8x8xf32> to vector<8xf32>
    %108 = vector.shape_cast %107 : vector<8xf32> to vector<8x1xf32>
    %109 = vector.broadcast %108 : vector<8x1xf32> to vector<8x8xf32>
    %110 = arith.subf %106, %109 : vector<8x8xf32>
    %111 = math.exp %110 : vector<8x8xf32>
    %cst_48 = arith.constant dense<0.000000e+00> : vector<8xf32>
    %112 = vector.multi_reduction <add>, %111, %cst_48 [1] : vector<8x8xf32> to vector<8xf32>
    %113 = vector.shape_cast %112 : vector<8xf32> to vector<8x1xf32>
    %114 = tpu.reciprocal %113 {approx = true} : vector<8x1xf32> -> vector<8x1xf32>
    %115 = vector.broadcast %114 : vector<8x1xf32> to vector<8x8xf32>
    %116 = arith.mulf %111, %115 : vector<8x8xf32>
    %117 = arith.truncf %116 : vector<8x8xf32> to vector<8x8xbf16>
    %cst_49 = arith.constant dense<0.000000e+00> : vector<8x8xf32>
    %118 = tpu.matmul %117, %103, %cst_49 {dimension_numbers = #tpu.dot_dimension_numbers<[1], [0], [0], [1], [0, 0, 1, 1], [], []>} : vector<8x8xbf16>, vector<8x8xbf16>, vector<8x8xf32> -> vector<8x8xf32>
    %c8_50 = arith.constant 8 : index
    %c8_51 = arith.constant 8 : index
    %119 = vector.load %arg18[%c8_50, %c8_51] : memref<16x32xf32, #tpu.memory_space<vmem>>, vector<8x8xf32>
    tpu.vector_store %arg18[%c8_50, %c8_51], %118 {strides = array<i32>} : memref<16x32xf32, #tpu.memory_space<vmem>>, vector<8x8xf32>,
    %120 = vector.extract_strided_slice %9 {offsets = [8, 8], sizes = [8, 8], strides = [1, 1]} : vector<16x32xbf16> to vector<8x8xbf16>
    %c8_52 = arith.constant 8 : index
    %c8_53 = arith.constant 8 : index
    %121 = vector.load %arg3[%c8_52, %c8_53] : memref<16x32xbf16, #tpu.memory_space<vmem>>, vector<8x8xbf16>
    %cst_54 = arith.constant dense<0.000000e+00> : vector<8x8xf32>
    %122 = tpu.matmul %120, %121, %cst_54 {dimension_numbers = #tpu.dot_dimension_numbers<[1], [1], [0], [0], [0, 0, 1, 0], [], []>} : vector<8x8xbf16>, vector<8x8xbf16>, vector<8x8xf32> -> vector<8x8xf32>
    %123 = vector.broadcast %83 : vector<1x8xf32> to vector<8x8xf32>
    %124 = arith.addf %122, %123 : vector<8x8xf32>
    %cst_55 = arith.constant dense<0xFF800000> : vector<8xf32>
    %125 = vector.multi_reduction <maximumf>, %124, %cst_55 [1] : vector<8x8xf32> to vector<8xf32>
    %126 = vector.shape_cast %125 : vector<8xf32> to vector<8x1xf32>
    %127 = vector.broadcast %126 : vector<8x1xf32> to vector<8x8xf32>
    %128 = arith.subf %124, %127 : vector<8x8xf32>
    %129 = math.exp %128 : vector<8x8xf32>
    %cst_56 = arith.constant dense<0.000000e+00> : vector<8xf32>
    %130 = vector.multi_reduction <add>, %129, %cst_56 [1] : vector<8x8xf32> to vector<8xf32>
    %131 = vector.shape_cast %130 : vector<8xf32> to vector<8x1xf32>
    %132 = tpu.reciprocal %131 {approx = true} : vector<8x1xf32> -> vector<8x1xf32>
    %133 = vector.broadcast %132 : vector<8x1xf32> to vector<8x8xf32>
    %134 = arith.mulf %129, %133 : vector<8x8xf32>
    %135 = arith.truncf %134 : vector<8x8xf32> to vector<8x8xbf16>
    %cst_57 = arith.constant dense<0.000000e+00> : vector<8x8xf32>
    %136 = tpu.matmul %135, %121, %cst_57 {dimension_numbers = #tpu.dot_dimension_numbers<[1], [0], [0], [1], [0, 0, 1, 1], [], []>} : vector<8x8xbf16>, vector<8x8xbf16>, vector<8x8xf32> -> vector<8x8xf32>
    %c8_58 = arith.constant 8 : index
    %c16_59 = arith.constant 16 : index
    %137 = vector.load %arg18[%c8_58, %c16_59] : memref<16x32xf32, #tpu.memory_space<vmem>>, vector<8x8xf32>
    tpu.vector_store %arg18[%c8_58, %c16_59], %136 {strides = array<i32>} : memref<16x32xf32, #tpu.memory_space<vmem>>, vector<8x8xf32>,
    %138 = vector.extract_strided_slice %9 {offsets = [8, 24], sizes = [8, 8], strides = [1, 1]} : vector<16x32xbf16> to vector<8x8xbf16>
    %c8_60 = arith.constant 8 : index
    %c24_61 = arith.constant 24 : index
    %139 = vector.load %arg3[%c8_60, %c24_61] : memref<16x32xbf16, #tpu.memory_space<vmem>>, vector<8x8xbf16>
    %cst_62 = arith.constant dense<0.000000e+00> : vector<8x8xf32>
    %140 = tpu.matmul %138, %139, %cst_62 {dimension_numbers = #tpu.dot_dimension_numbers<[1], [1], [0], [0], [0, 0, 1, 0], [], []>} : vector<8x8xbf16>, vector<8x8xbf16>, vector<8x8xf32> -> vector<8x8xf32>
    %141 = vector.broadcast %83 : vector<1x8xf32> to vector<8x8xf32>
    %142 = arith.addf %140, %141 : vector<8x8xf32>
    %cst_63 = arith.constant dense<0xFF800000> : vector<8xf32>
    %143 = vector.multi_reduction <maximumf>, %142, %cst_63 [1] : vector<8x8xf32> to vector<8xf32>
    %144 = vector.shape_cast %143 : vector<8xf32> to vector<8x1xf32>
    %145 = vector.broadcast %144 : vector<8x1xf32> to vector<8x8xf32>
    %146 = arith.subf %142, %145 : vector<8x8xf32>
    %147 = math.exp %146 : vector<8x8xf32>
    %cst_64 = arith.constant dense<0.000000e+00> : vector<8xf32>
    %148 = vector.multi_reduction <add>, %147, %cst_64 [1] : vector<8x8xf32> to vector<8xf32>
    %149 = vector.shape_cast %148 : vector<8xf32> to vector<8x1xf32>
    %150 = tpu.reciprocal %149 {approx = true} : vector<8x1xf32> -> vector<8x1xf32>
    %151 = vector.broadcast %150 : vector<8x1xf32> to vector<8x8xf32>
    %152 = arith.mulf %147, %151 : vector<8x8xf32>
    %153 = arith.truncf %152 : vector<8x8xf32> to vector<8x8xbf16>
    %cst_65 = arith.constant dense<0.000000e+00> : vector<8x8xf32>
    %154 = tpu.matmul %153, %139, %cst_65 {dimension_numbers = #tpu.dot_dimension_numbers<[1], [0], [0], [1], [0, 0, 1, 1], [], []>} : vector<8x8xbf16>, vector<8x8xbf16>, vector<8x8xf32> -> vector<8x8xf32>
    %c8_66 = arith.constant 8 : index
    %c24_67 = arith.constant 24 : index
    %155 = vector.load %arg18[%c8_66, %c24_67] : memref<16x32xf32, #tpu.memory_space<vmem>>, vector<8x8xf32>
    tpu.vector_store %arg18[%c8_66, %c24_67], %154 {strides = array<i32>} : memref<16x32xf32, #tpu.memory_space<vmem>>, vector<8x8xf32>,
    %c0_68 = arith.constant 0 : index
    %c0_69 = arith.constant 0 : index
    %156 = vector.load %arg18[%c0_68, %c0_69] : memref<16x32xf32, #tpu.memory_space<vmem>>, vector<16x32xf32>
    %157 = arith.truncf %156 : vector<16x32xf32> to vector<16x32xbf16>
    %c0_70 = arith.constant 0 : index
    %c0_71 = arith.constant 0 : index
    %c0_72 = arith.constant 0 : index
    %158 = vector.load %arg6[%c0_70, %c0_71, %c0_72] : memref<1x32x32xbf16, #tpu.memory_space<vmem>>, vector<1x32x32xbf16>
    %159 = vector.shape_cast %158 : vector<1x32x32xbf16> to vector<32x32xbf16>
    %cst_73 = arith.constant dense<0.000000e+00> : vector<16x32xf32>
    %160 = tpu.matmul %157, %159, %cst_73 {dimension_numbers = #tpu.dot_dimension_numbers<[1], [0], [0], [1], [0, 0, 1, 1], [], []>} : vector<16x32xbf16>, vector<32x32xbf16>, vector<16x32xf32> -> vector<16x32xf32>
    %c0_74 = arith.constant 0 : index
    %c0_75 = arith.constant 0 : index
    %c0_76 = arith.constant 0 : index
    %161 = vector.load %arg7[%c0_74, %c0_75, %c0_76] : memref<1x1x32xf32, #tpu.memory_space<vmem>>, vector<1x1x32xf32>
    %162 = vector.shape_cast %161 : vector<1x1x32xf32> to vector<1x32xf32>
    %163 = vector.broadcast %162 : vector<1x32xf32> to vector<16x32xf32>
    %164 = arith.addf %160, %163 : vector<16x32xf32>
    %165 = arith.addf %164, %3 : vector<16x32xf32>
    %c0_77 = arith.constant 0 : index
    %c0_78 = arith.constant 0 : index
    %c0_79 = arith.constant 0 : index
    %166 = vector.load %arg8[%c0_77, %c0_78, %c0_79] : memref<1x1x32xf32, #tpu.memory_space<vmem>>, vector<1x1x32xf32>
    %167 = vector.shape_cast %166 : vector<1x1x32xf32> to vector<1x32xf32>
    %c0_80 = arith.constant 0 : index
    %c0_81 = arith.constant 0 : index
    %c0_82 = arith.constant 0 : index
    %168 = vector.load %arg9[%c0_80, %c0_81, %c0_82] : memref<1x1x32xf32, #tpu.memory_space<vmem>>, vector<1x1x32xf32>
    %169 = vector.shape_cast %168 : vector<1x1x32xf32> to vector<1x32xf32>
    %cst_83 = arith.constant dense<0.000000e+00> : vector<16xf32>
    %170 = vector.multi_reduction <add>, %165, %cst_83 [1] : vector<16x32xf32> to vector<16xf32>
    %171 = vector.shape_cast %170 : vector<16xf32> to vector<16x1xf32>
    %cst_84 = arith.constant 3.200000e+01 : f32
    %172 = vector.broadcast %cst_84 : f32 to vector<16x1xf32>
    %173 = arith.divf %171, %172 : vector<16x1xf32>
    %174 = vector.broadcast %173 : vector<16x1xf32> to vector<16x32xf32>
    %175 = arith.subf %165, %174 : vector<16x32xf32>
    %176 = arith.mulf %175, %175 : vector<16x32xf32>
    %cst_85 = arith.constant dense<0.000000e+00> : vector<16xf32>
    %177 = vector.multi_reduction <add>, %176, %cst_85 [1] : vector<16x32xf32> to vector<16xf32>
    %178 = vector.shape_cast %177 : vector<16xf32> to vector<16x1xf32>
    %cst_86 = arith.constant 3.200000e+01 : f32
    %179 = vector.broadcast %cst_86 : f32 to vector<16x1xf32>
    %180 = arith.divf %178, %179 : vector<16x1xf32>
    %181 = vector.broadcast %173 : vector<16x1xf32> to vector<16x32xf32>
    %182 = arith.subf %165, %181 : vector<16x32xf32>
    %cst_87 = arith.constant 9.99999974E-6 : f32
    %183 = vector.broadcast %cst_87 : f32 to vector<16x1xf32>
    %184 = arith.addf %180, %183 : vector<16x1xf32>
    %185 = math.rsqrt %184 : vector<16x1xf32>
    %186 = vector.broadcast %185 : vector<16x1xf32> to vector<16x32xf32>
    %187 = arith.mulf %182, %186 : vector<16x32xf32>
    %188 = vector.broadcast %167 : vector<1x32xf32> to vector<16x32xf32>
    %189 = arith.mulf %187, %188 : vector<16x32xf32>
    %190 = vector.broadcast %169 : vector<1x32xf32> to vector<16x32xf32>
    %191 = arith.addf %189, %190 : vector<16x32xf32>
    %192 = vector.broadcast %6 : vector<16x1xf32> to vector<16x32xf32>
    %193 = arith.mulf %191, %192 : vector<16x32xf32>
    %194 = arith.truncf %193 : vector<16x32xf32> to vector<16x32xbf16>
    %c0_88 = arith.constant 0 : index
    %c0_89 = arith.constant 0 : index
    %c0_90 = arith.constant 0 : index
    %195 = vector.load %arg10[%c0_88, %c0_89, %c0_90] : memref<1x32x64xbf16, #tpu.memory_space<vmem>>, vector<1x32x64xbf16>
    %196 = vector.shape_cast %195 : vector<1x32x64xbf16> to vector<32x64xbf16>
    %cst_91 = arith.constant dense<0.000000e+00> : vector<16x64xf32>
    %197 = tpu.matmul %194, %196, %cst_91 {dimension_numbers = #tpu.dot_dimension_numbers<[1], [0], [0], [1], [0, 0, 1, 1], [], []>} : vector<16x32xbf16>, vector<32x64xbf16>, vector<16x64xf32> -> vector<16x64xf32>
    %c0_92 = arith.constant 0 : index
    %c0_93 = arith.constant 0 : index
    %c0_94 = arith.constant 0 : index
    %198 = vector.load %arg11[%c0_92, %c0_93, %c0_94] : memref<1x1x64xf32, #tpu.memory_space<vmem>>, vector<1x1x64xf32>
    %199 = vector.shape_cast %198 : vector<1x1x64xf32> to vector<1x64xf32>
    %200 = vector.broadcast %199 : vector<1x64xf32> to vector<16x64xf32>
    %201 = arith.addf %197, %200 : vector<16x64xf32>
    %cst_95 = arith.constant 0.000000e+00 : f32
    %202 = vector.broadcast %cst_95 : f32 to vector<16x64xf32>
    %203 = arith.maximumf %201, %202 : vector<16x64xf32>
    %204 = arith.truncf %203 : vector<16x64xf32> to vector<16x64xbf16>
    %c0_96 = arith.constant 0 : index
    %c0_97 = arith.constant 0 : index
    %c0_98 = arith.constant 0 : index
    %205 = vector.load %arg12[%c0_96, %c0_97, %c0_98] : memref<1x64x32xbf16, #tpu.memory_space<vmem>>, vector<1x64x32xbf16>
    %206 = vector.shape_cast %205 : vector<1x64x32xbf16> to vector<64x32xbf16>
    %cst_99 = arith.constant dense<0.000000e+00> : vector<16x32xf32>
    %207 = tpu.matmul %204, %206, %cst_99 {dimension_numbers = #tpu.dot_dimension_numbers<[1], [0], [0], [1], [0, 0, 1, 1], [], []>} : vector<16x64xbf16>, vector<64x32xbf16>, vector<16x32xf32> -> vector<16x32xf32>
    %c0_100 = arith.constant 0 : index
    %c0_101 = arith.constant 0 : index
    %c0_102 = arith.constant 0 : index
    %208 = vector.load %arg13[%c0_100, %c0_101, %c0_102] : memref<1x1x32xf32, #tpu.memory_space<vmem>>, vector<1x1x32xf32>
    %209 = vector.shape_cast %208 : vector<1x1x32xf32> to vector<1x32xf32>
    %210 = vector.broadcast %209 : vector<1x32xf32> to vector<16x32xf32>
    %211 = arith.addf %207, %210 : vector<16x32xf32>
    %212 = arith.addf %211, %193 : vector<16x32xf32>
    %c0_103 = arith.constant 0 : index
    %c0_104 = arith.constant 0 : index
    %c0_105 = arith.constant 0 : index
    %213 = vector.load %arg14[%c0_103, %c0_104, %c0_105] : memref<1x1x32xf32, #tpu.memory_space<vmem>>, vector<1x1x32xf32>
    %214 = vector.shape_cast %213 : vector<1x1x32xf32> to vector<1x32xf32>
    %c0_106 = arith.constant 0 : index
    %c0_107 = arith.constant 0 : index
    %c0_108 = arith.constant 0 : index
    %215 = vector.load %arg15[%c0_106, %c0_107, %c0_108] : memref<1x1x32xf32, #tpu.memory_space<vmem>>, vector<1x1x32xf32>
    %216 = vector.shape_cast %215 : vector<1x1x32xf32> to vector<1x32xf32>
    %cst_109 = arith.constant dense<0.000000e+00> : vector<16xf32>
    %217 = vector.multi_reduction <add>, %212, %cst_109 [1] : vector<16x32xf32> to vector<16xf32>
    %218 = vector.shape_cast %217 : vector<16xf32> to vector<16x1xf32>
    %cst_110 = arith.constant 3.200000e+01 : f32
    %219 = vector.broadcast %cst_110 : f32 to vector<16x1xf32>
    %220 = arith.divf %218, %219 : vector<16x1xf32>
    %221 = vector.broadcast %220 : vector<16x1xf32> to vector<16x32xf32>
    %222 = arith.subf %212, %221 : vector<16x32xf32>
    %223 = arith.mulf %222, %222 : vector<16x32xf32>
    %cst_111 = arith.constant dense<0.000000e+00> : vector<16xf32>
    %224 = vector.multi_reduction <add>, %223, %cst_111 [1] : vector<16x32xf32> to vector<16xf32>
    %225 = vector.shape_cast %224 : vector<16xf32> to vector<16x1xf32>
    %cst_112 = arith.constant 3.200000e+01 : f32
    %226 = vector.broadcast %cst_112 : f32 to vector<16x1xf32>
    %227 = arith.divf %225, %226 : vector<16x1xf32>
    %228 = vector.broadcast %220 : vector<16x1xf32> to vector<16x32xf32>
    %229 = arith.subf %212, %228 : vector<16x32xf32>
    %cst_113 = arith.constant 9.99999974E-6 : f32
    %230 = vector.broadcast %cst_113 : f32 to vector<16x1xf32>
    %231 = arith.addf %227, %230 : vector<16x1xf32>
    %232 = math.rsqrt %231 : vector<16x1xf32>
    %233 = vector.broadcast %232 : vector<16x1xf32> to vector<16x32xf32>
    %234 = arith.mulf %229, %233 : vector<16x32xf32>
    %235 = vector.broadcast %214 : vector<1x32xf32> to vector<16x32xf32>
    %236 = arith.mulf %234, %235 : vector<16x32xf32>
    %237 = vector.broadcast %216 : vector<1x32xf32> to vector<16x32xf32>
    %238 = arith.addf %236, %237 : vector<16x32xf32>
    %239 = vector.broadcast %6 : vector<16x1xf32> to vector<16x32xf32>
    %240 = arith.mulf %238, %239 : vector<16x32xf32>
    %c0_114 = arith.constant 0 : index
    %c0_115 = arith.constant 0 : index
    %241 = vector.load %arg17[%c0_114, %c0_115] : memref<16x32xf32, #tpu.memory_space<vmem>>, vector<16x32xf32>
    tpu.vector_store %arg17[%c0_114, %c0_115], %240 {strides = array<i32>} : memref<16x32xf32, #tpu.memory_space<vmem>>, vector<16x32xf32>,
    %c1_i32 = arith.constant 1 : i32
    %242 = arith.cmpi eq, %arg1, %c1_i32 : i32
    %243 = arith.extui %242 : i1 to i32
    %c0_i32_116 = arith.constant 0 : i32
    %244 = arith.cmpi ne, %243, %c0_i32_116 : i32
    scf.if %244 {
      %c0_117 = arith.constant 0 : index
      %c0_118 = arith.constant 0 : index
      %c0_119 = arith.constant 0 : index
      %245 = vector.load %arg16[%c0_117, %c0_118, %c0_119] : memref<1x16x32xf32, #tpu.memory_space<vmem>>, vector<1x16x32xf32>
      %246 = vector.shape_cast %245 : vector<1x16x32xf32> to vector<16x32xf32>
      %247 = vector.shape_cast %240 : vector<16x32xf32> to vector<1x16x32xf32>
      tpu.vector_store %arg16[%c0_117, %c0_118, %c0_119], %247 {strides = array<i32>} : memref<1x16x32xf32, #tpu.memory_space<vmem>>, vector<1x16x32xf32>,
    } else {
    }
    return
  }
  func.func @transform_0(%arg0: i32, %arg1: i32) -> (i32, i32, i32) {
    %c0_i32 = arith.constant 0 : i32
    %c0_i32_0 = arith.constant 0 : i32
    %c0_i32_1 = arith.constant 0 : i32
    return %arg0, %c0_i32, %c0_i32_0 : i32, i32, i32
  }
  func.func @transform_1(%arg0: i32, %arg1: i32) -> (i32, i32) {
    %c0_i32 = arith.constant 0 : i32
    %c0_i32_0 = arith.constant 0 : i32
    %c0_i32_1 = arith.constant 0 : i32
    return %c0_i32, %c0_i32_0 : i32, i32
  }
  func.func @transform_2(%arg0: i32, %arg1: i32) -> (i32, i32) {
    %c0_i32 = arith.constant 0 : i32
    %c0_i32_0 = arith.constant 0 : i32
    %c0_i32_1 = arith.constant 0 : i32
    return %c0_i32, %c0_i32_0 : i32, i32
  }
  func.func @transform_3(%arg0: i32, %arg1: i32) -> (i32, i32, i32) {
    %c0_i32 = arith.constant 0 : i32
    %c0_i32_0 = arith.constant 0 : i32
    %c0_i32_1 = arith.constant 0 : i32
    return %arg0, %c0_i32, %c0_i32_0 : i32, i32, i32
  }
  func.func @transform_4(%arg0: i32, %arg1: i32) -> (i32, i32, i32) {
    %c0_i32 = arith.constant 0 : i32
    %c0_i32_0 = arith.constant 0 : i32
    %c0_i32_1 = arith.constant 0 : i32
    return %arg1, %c0_i32, %c0_i32_0 : i32, i32, i32
  }
  func.func @transform_5(%arg0: i32, %arg1: i32) -> (i32, i32, i32) {
    %c0_i32 = arith.constant 0 : i32
    %c0_i32_0 = arith.constant 0 : i32
    %c0_i32_1 = arith.constant 0 : i32
    return %arg1, %c0_i32, %c0_i32_0 : i32, i32, i32
  }
  func.func @transform_6(%arg0: i32, %arg1: i32) -> (i32, i32, i32) {
    %c0_i32 = arith.constant 0 : i32
    %c0_i32_0 = arith.constant 0 : i32
    %c0_i32_1 = arith.constant 0 : i32
    return %arg1, %c0_i32, %c0_i32_0 : i32, i32, i32
  }
  func.func @transform_7(%arg0: i32, %arg1: i32) -> (i32, i32, i32) {
    %c0_i32 = arith.constant 0 : i32
    %c0_i32_0 = arith.constant 0 : i32
    %c0_i32_1 = arith.constant 0 : i32
    return %arg1, %c0_i32, %c0_i32_0 : i32, i32, i32
  }
  func.func @transform_8(%arg0: i32, %arg1: i32) -> (i32, i32, i32) {
    %c0_i32 = arith.constant 0 : i32
    %c0_i32_0 = arith.constant 0 : i32
    %c0_i32_1 = arith.constant 0 : i32
    return %arg1, %c0_i32, %c0_i32_0 : i32, i32, i32
  }
  func.func @transform_9(%arg0: i32, %arg1: i32) -> (i32, i32, i32) {
    %c0_i32 = arith.constant 0 : i32
    %c0_i32_0 = arith.constant 0 : i32
    %c0_i32_1 = arith.constant 0 : i32
    return %arg1, %c0_i32, %c0_i32_0 : i32, i32, i32
  }
  func.func @transform_10(%arg0: i32, %arg1: i32) -> (i32, i32, i32) {
    %c0_i32 = arith.constant 0 : i32
    %c0_i32_0 = arith.constant 0 : i32
    %c0_i32_1 = arith.constant 0 : i32
    return %arg1, %c0_i32, %c0_i32_0 : i32, i32, i32
  }
  func.func @transform_11(%arg0: i32, %arg1: i32) -> (i32, i32, i32) {
    %c0_i32 = arith.constant 0 : i32
    %c0_i32_0 = arith.constant 0 : i32
    %c0_i32_1 = arith.constant 0 : i32
    return %arg1, %c0_i32, %c0_i32_0 : i32, i32, i32
  }
  func.func @transform_12(%arg0: i32, %arg1: i32) -> (i32, i32, i32) {
    %c0_i32 = arith.constant 0 : i32
    %c0_i32_0 = arith.constant 0 : i32
    %c0_i32_1 = arith.constant 0 : i32
    return %arg1, %c0_i32, %c0_i32_0 : i32, i32, i32
  }
  func.func @transform_13(%arg0: i32, %arg1: i32) -> (i32, i32, i32) {
    %c0_i32 = arith.constant 0 : i32
    %c0_i32_0 = arith.constant 0 : i32
    %c0_i32_1 = arith.constant 0 : i32
    return %arg1, %c0_i32, %c0_i32_0 : i32, i32, i32
  }
  func.func @transform_14(%arg0: i32, %arg1: i32) -> (i32, i32, i32) {
    %c0_i32 = arith.constant 0 : i32
    %c0_i32_0 = arith.constant 0 : i32
    %c0_i32_1 = arith.constant 0 : i32
    return %arg0, %c0_i32, %c0_i32_0 : i32, i32, i32
  }
}

</mosaic_0001>

<llo_original>
// kernel: decoder_forward.3
$region0: #{decoder_forward.3}
  #allocation0 [shape = 'u32[]', space=smem, size = 0x4, offset = 0x4, fixed_abs, tag = 'smem constant byte address 0x4 - core index']
  #allocation1 [shape = 'u32[144,128]{1,0:T(1,128)}', space=vmem, size = 0x12000, scoped, tag = 'internal scratch']
  %s0 = inlined_call_operand.vmem [shape: f32[32,32], index: 0, kind: input, shape index: {}]
  %s1 = inlined_call_operand.vmem [shape: bf16[32,64], index: 1, kind: input, shape index: {}]
  %s2 = inlined_call_operand.vmem [shape: f32[32,64], index: 2, kind: output, shape index: {}]
  %s3 = sld [smem:[#allocation0]]
  $region18: #{decoder_forward.3} parent=0
    _
  %s5 = ssub.s32 1, %s3
  %s6 = scalar_select 0, %s5, %s3
  // Predicated region
  $region2: #{decoder_forward.3} parent=0 // pred_check
    _
  $region3: #{decoder_forward.3} parent=0 // pred_check_branch
    %8 = sbr.rel (0) target = $region5
  $region4: #{decoder_forward.3} parent=0 // pred_region
    _
  $region5: #{decoder_forward.3} parent=0 // pred_fallthru
    _
  // Predicated region
  $region6: #{decoder_forward.3} parent=0 // pred_check
    _
  $region7: #{decoder_forward.3} parent=0 // pred_check_branch
    %10 = sbr.rel (0) target = $region9
  $region8: #{decoder_forward.3} parent=0 // pred_region
    _
  $region9: #{decoder_forward.3} parent=0 // pred_fallthru
    _
  %v12 = vld [vmem:[%s0] sm:$0xff]
  %v13 = vld [vmem:[%s0 + $0x8] sm:$0xff]
  %v14 = vld [vmem:[%s0 + $0x10] sm:$0xff]
  %v15 = vld [vmem:[%s0 + $0x18] sm:$0xff]
  %v16 = vpack.c.bf16 %v13, %v12
  %v17 = vpack.c.bf16 %v15, %v14
  %v18 = vld [vmem:[%s1] sm:$0xf]
  %v19 = vld [vmem:[%s1 + $0x4] sm:$0xf]
  %v20 = vld [vmem:[%s1 + $0x8] sm:$0xf]
  %v21 = vld [vmem:[%s1 + $0xc] sm:$0xf]
  %v26 = vunpack.c.l.b16 %v18
  %v27 = vunpack.c.l.b16 %v19
  %v28 = vunpack.c.l.b16 %v20
  %v29 = vunpack.c.l.b16 %v21
  %v30 = vpack.c.b16 %v27, %v26
  %v31 = vpack.c.b16 %v29, %v28
  %vm34 = vcmask 261120
  %v36 = vsel %vm34, %v16, 0
  %v39 = vsel %vm34, %v17, 0
  %41 = vmatprep.subr.bf16.mxu0 0
  %42 = vmatpush1.bf16.msra.mxu0 %v30
  %43 = vmatprep.subr.bf16.mxu0 0
  %44 = vmatpush1.bf16.msra.mxu0 %v31
  %45 = vmatprep.subr.bf16.mxu0 0
  %46 = vmatpush1.bf16.msra.mxu0 0
  %47 = vmatprep.subr.bf16.mxu0 0
  %48 = vmatpush1.bf16.msra.mxu0 0
  %49 = vmatprep.subr.bf16.mxu0 0
  %50 = vmatpush1.bf16.msra.mxu0 0
  %51 = vmatprep.subr.bf16.mxu0 0
  %52 = vmatpush1.bf16.msra.mxu0 0
  %53 = vmatprep.subr.bf16.mxu0 0
  %54 = vmatpush1.bf16.msra.mxu0 0
  %55 = vmatprep.subr.bf16.mxu0 0
  %56 = vmatpush1.bf16.msra.mxu0 0
  %57 = vmatprep.subr.bf16.mxu0 0
  %58 = vmatpush1.bf16.msra.mxu0 0
  %59 = vmatprep.subr.bf16.mxu0 0
  %60 = vmatpush1.bf16.msra.mxu0 0
  %61 = vmatprep.subr.bf16.mxu0 0
  %62 = vmatpush1.bf16.msra.mxu0 0
  %63 = vmatprep.subr.bf16.mxu0 0
  %64 = vmatpush1.bf16.msra.mxu0 0
  %65 = vmatprep.subr.bf16.mxu0 0
  %66 = vmatpush1.bf16.msra.mxu0 0
  %67 = vmatprep.subr.bf16.mxu0 0
  %68 = vmatpush1.bf16.msra.mxu0 0
  %69 = vmatprep.subr.bf16.mxu0 0
  %70 = vmatpush1.bf16.msra.mxu0 0
  %71 = vmatprep.subr.bf16.mxu0 0
  %72 = vmatpush1.bf16.msra.mxu0 0
  %73 = vmatprep.mubr.bf16.mxu0 0
  %74 = vmatmul.mubr.bf16.gmra.mrb[0].mxu0 %v36
  %v75 = vpop.f32.mrb[0].mxu0
  %v76 = vadd.f32 0.0, %v75
  %v77 = vpop.f32.mrb[0].mxu0
  %v78 = vpop.f32.mrb[0].mxu0
  %v79 = vadd.f32 0.0, %v78
  %v80 = vpop.f32.mrb[0].mxu0
  %81 = vmatprep.mubr.bf16.mxu0 0
  %82 = vmatmul.mubr.bf16.gmra.mrb[0].mxu0 %v39
  %v83 = vpop.f32.mrb[0].mxu0
  %v84 = vadd.f32 0.0, %v83
  %v85 = vpop.f32.mrb[0].mxu0
  %v86 = vpop.f32.mrb[0].mxu0
  %v87 = vadd.f32 0.0, %v86
  %v88 = vpop.f32.mrb[0].mxu0
  %89 = vdwg.mxu0
  %vm90 = vcmask 523264
  %91 = vst.msk [vmem:[%s2] sm:$0xff] %vm90, %v76
  %92 = vst.msk [vmem:[%s2 + $0x8] sm:$0xff] %vm90, %v79
  %93 = vst.msk [vmem:[%s2 + $0x10] sm:$0xff] %vm90, %v84
  %94 = vst.msk [vmem:[%s2 + $0x18] sm:$0xff] %vm90, %v87
  // Predicated region
  $region10: #{decoder_forward.3} parent=0 // pred_check
    _
  $region11: #{decoder_forward.3} parent=0 // pred_check_branch
    %96 = sbr.rel (0) target = $region13
  $region12: #{decoder_forward.3} parent=0 // pred_region
    _
  $region13: #{decoder_forward.3} parent=0 // pred_fallthru
    _
  // Predicated region
  $region14: #{decoder_forward.3} parent=0 // pred_check
    _
  $region15: #{decoder_forward.3} parent=0 // pred_check_branch
    %98 = sbr.rel (0) target = $region17
  $region16: #{decoder_forward.3} parent=0 // pred_region
    _
  $region17: #{decoder_forward.3} parent=0 // pred_fallthru
    _

// kernel: decoder_forward.2
$region0: #{decoder_forward.2}
  #allocation0 [shape = 'u32[]', space=smem, size = 0x4, offset = 0x4, fixed_abs, tag = 'smem constant byte address 0x4 - core index']
  #allocation1 [shape = 'u32[144,128]{1,0:T(1,128)}', space=vmem, size = 0x12000, scoped, tag = 'internal scratch']
  #allocation2 [shape = 'f32[16,32]{1,0:T(8,128)}', space=vmem, size = 0x2000, scoped, tag = 'scratch operand']
  #allocation3 [shape = 'f32[16,32]{1,0:T(8,128)}', space=vmem, size = 0x2000, scoped, tag = 'scratch operand']
  %s0 = inlined_call_operand.vmem [shape: f32[2,16,32], index: 0, kind: input, shape index: {}]
  %s1 = inlined_call_operand.vmem [shape: bf16[16,32], index: 1, kind: input, shape index: {}]
  %s2 = inlined_call_operand.vmem [shape: f32[2,8], index: 2, kind: input, shape index: {}]
  %s3 = inlined_call_operand.vmem [shape: f32[2,16,1], index: 3, kind: input, shape index: {}]
  %s4 = inlined_call_operand.vmem [shape: bf16[2,32,32], index: 4, kind: input, shape index: {}]
  %s5 = inlined_call_operand.vmem [shape: f32[2,1,32], index: 5, kind: input, shape index: {}]
  %s6 = inlined_call_operand.vmem [shape: f32[2,1,32], index: 6, kind: input, shape index: {}]
  %s7 = inlined_call_operand.vmem [shape: f32[2,1,32], index: 7, kind: input, shape index: {}]
  %s8 = inlined_call_operand.vmem [shape: bf16[2,32,64], index: 8, kind: input, shape index: {}]
  %s9 = inlined_call_operand.vmem [shape: f32[2,1,64], index: 9, kind: input, shape index: {}]
  %s10 = inlined_call_operand.vmem [shape: bf16[2,64,32], index: 10, kind: input, shape index: {}]
  %s11 = inlined_call_operand.vmem [shape: f32[2,1,32], index: 11, kind: input, shape index: {}]
  %s12 = inlined_call_operand.vmem [shape: f32[2,1,32], index: 12, kind: input, shape index: {}]
  %s13 = inlined_call_operand.vmem [shape: f32[2,1,32], index: 13, kind: input, shape index: {}]
  %s14 = inlined_call_operand.vmem [shape: f32[2,16,32], index: 14, kind: output, shape index: {}]
  %s15 = sld [smem:[#allocation0]]
  $region97: #{decoder_forward.2} parent=0
    _
  %s17 = ssub.s32 1, %s15
  %s18 = scalar_select 0, %s17, %s15
  loop: start=0, step=1, limit=6
  $region2: #{decoder_forward.2} parent=0 // loop_pre_header
    _
  $region3: #{decoder_forward.2} parent=0 // loop_header
    %s20 = sphi 0, %s24
    %p21 = scmp.ge.s32.totalorder %s20, 6
    %s27 = sphi 0, %s39
    %s28 = sphi 0, %s35
    %s29 = sphi 0, %s27
    %s30 = sphi 0, %s28
    %s31 = sphi 0, %s29
    %s32 = sphi 0, %s30
    %s42 = sphi 0, %s44
    %s45 = sphi 0, %s42
    %s46 = sphi 0, %s45
    %s62 = sphi 0, %s46
    %s66 = sphi 0, %s66
    %s68 = sphi 0, %s66
    %s69 = sphi 0, %s68
    %s83 = sphi 0, %s69
    %s87 = sphi 0, %s87
    %s89 = sphi 0, %s87
    %s90 = sphi 0, %s89
    %s104 = sphi 0, %s90
    %s110 = sphi 0, %s112
    %s113 = sphi 0, %s110
    %s114 = sphi 0, %s113
    %s130 = sphi 0, %s114
    %s136 = sphi 0, %s138
    %s139 = sphi 0, %s136
    %s140 = sphi 0, %s139
    %s156 = sphi 0, %s140
    %s162 = sphi 0, %s164
    %s165 = sphi 0, %s162
    %s166 = sphi 0, %s165
    %s182 = sphi 0, %s166
    %s188 = sphi 0, %s190
    %s191 = sphi 0, %s188
    %s192 = sphi 0, %s191
    %s208 = sphi 0, %s192
    %s214 = sphi 0, %s216
    %s217 = sphi 0, %s214
    %s218 = sphi 0, %s217
    %s234 = sphi 0, %s218
    %s240 = sphi 0, %s242
    %s243 = sphi 0, %s240
    %s244 = sphi 0, %s243
    %s260 = sphi 0, %s244
    %s266 = sphi 0, %s268
    %s269 = sphi 0, %s266
    %s270 = sphi 0, %s269
    %s286 = sphi 0, %s270
    %s292 = sphi 0, %s294
    %s295 = sphi 0, %s292
    %s296 = sphi 0, %s295
    %s312 = sphi 0, %s296
    %s318 = sphi 0, %s320
    %s321 = sphi 0, %s318
    %s322 = sphi 0, %s321
    %s338 = sphi 0, %s322
    %s344 = sphi 0, %s346
    %s347 = sphi 0, %s344
    %s348 = sphi 0, %s347
    %s364 = sphi 0, %s348
    %s370 = sphi 0, %s372
    %s373 = sphi 0, %s370
    %s374 = sphi 0, %s373
    %s390 = sphi 0, %s374
    %s396 = sphi 0, %s398
    %s399 = sphi 0, %s396
    %s400 = sphi 0, %s399
    %s416 = sphi 0, %s400
  $region4: #{decoder_forward.2} parent=0 // loop_header_branch
    %23 = sbr.rel (%p21) target = $region8
  $region5: #{decoder_forward.2} parent=0 // loop_body
    %s25 = ssub.s32 %s20, 1
    %s26 = ssub.s32 %s20, 2
    %s33 = sadd.s32 1, %s28
    %p34 = scmp.ge.s32.totalorder %s33, 2
    %s35 = scalar_select %p34, 0, %s33
    %s36 = sadd.s32 1, %s27
    %s37 = scalar_select %p34, %s36, %s27
    %p38 = scmp.ge.s32.totalorder %s37, 2
    %s39 = scalar_select %p38, 0, %s37
    %s40 = ssub.s32 %s27, %s39
    %p41 = scmp.eq.s32.totalorder %s40, 0
    %s43 = sadd.s32 %s42, 1
    %s44 = scalar_select %p41, %s42, %s43
    %p47 = pneg %p41
    %p48 = scmp.eq.s32.totalorder %s20, 3
    %p49 = por %p47, %p48
    %p50 = scmp.ne.s32.totalorder %s42, %s45
    %p51 = scmp.eq.s32.totalorder %s20, 0
    %p52 = por %p50, %p51
    %p53 = scmp.ne.s32.totalorder %s42, %s45
    %p54 = scmp.eq.s32.totalorder %s25, 3
    %p55 = por %p53, %p54
    %p56 = scmp.ne.s32.totalorder %s45, %s46
    %p57 = scmp.eq.s32.totalorder %s25, 0
    %p58 = por %p56, %p57
    %p59 = scmp.ne.s32.totalorder %s45, %s46
    %p60 = scmp.eq.s32.totalorder %s26, 3
    %p61 = por %p59, %p60
    %p63 = scmp.ne.s32.totalorder %s46, %s62
    %p64 = scmp.eq.s32.totalorder %s26, 0
    %p65 = por %p63, %p64
    %s67 = sadd.s32 %s66, 1
    %p70 = scmp.eq.s32.totalorder %s20, 3
    %p71 = scmp.ne.s32.totalorder %s66, %s68
    %p72 = scmp.eq.s32.totalorder %s20, 0
    %p73 = por %p71, %p72
    %p74 = scmp.ne.s32.totalorder %s66, %s68
    %p75 = scmp.eq.s32.totalorder %s25, 3
    %p76 = por %p74, %p75
    %p77 = scmp.ne.s32.totalorder %s68, %s69
    %p78 = scmp.eq.s32.totalorder %s25, 0
    %p79 = por %p77, %p78
    %p80 = scmp.ne.s32.totalorder %s68, %s69
    %p81 = scmp.eq.s32.totalorder %s26, 3
    %p82 = por %p80, %p81
    %p84 = scmp.ne.s32.totalorder %s69, %s83
    %p85 = scmp.eq.s32.totalorder %s26, 0
    %p86 = por %p84, %p85
    %s88 = sadd.s32 %s87, 1
    %p91 = scmp.eq.s32.totalorder %s20, 3
    %p92 = scmp.ne.s32.totalorder %s87, %s89
    %p93 = scmp.eq.s32.totalorder %s20, 0
    %p94 = por %p92, %p93
    %p95 = scmp.ne.s32.totalorder %s87, %s89
    %p96 = scmp.eq.s32.totalorder %s25, 3
    %p97 = por %p95, %p96
    %p98 = scmp.ne.s32.totalorder %s89, %s90
    %p99 = scmp.eq.s32.totalorder %s25, 0
    %p100 = por %p98, %p99
    %p101 = scmp.ne.s32.totalorder %s89, %s90
    %p102 = scmp.eq.s32.totalorder %s26, 3
    %p103 = por %p101, %p102
    %p105 = scmp.ne.s32.totalorder %s90, %s104
    %p106 = scmp.eq.s32.totalorder %s26, 0
    %p107 = por %p105, %p106
    %s108 = ssub.s32 %s27, %s39
    %p109 = scmp.eq.s32.totalorder %s108, 0
    %s111 = sadd.s32 %s110, 1
    %s112 = scalar_select %p109, %s110, %s111
    %p115 = pneg %p109
    %p116 = scmp.eq.s32.totalorder %s20, 3
    %p117 = por %p115, %p116
    %p118 = scmp.ne.s32.totalorder %s110, %s113
    %p119 = scmp.eq.s32.totalorder %s20, 0
    %p120 = por %p118, %p119
    %p121 = scmp.ne.s32.totalorder %s110, %s113
    %p122 = scmp.eq.s32.totalorder %s25, 3
    %p123 = por %p121, %p122
    %p124 = scmp.ne.s32.totalorder %s113, %s114
    %p125 = scmp.eq.s32.totalorder %s25, 0
    %p126 = por %p124, %p125
    %p127 = scmp.ne.s32.totalorder %s113, %s114
    %p128 = scmp.eq.s32.totalorder %s26, 3
    %p129 = por %p127, %p128
    %p131 = scmp.ne.s32.totalorder %s114, %s130
    %p132 = scmp.eq.s32.totalorder %s26, 0
    %p133 = por %p131, %p132
    %s134 = ssub.s32 %s28, %s35
    %p135 = scmp.eq.s32.totalorder %s134, 0
    %s137 = sadd.s32 %s136, 1
    %s138 = scalar_select %p135, %s136, %s137
    %p141 = pneg %p135
    %p142 = scmp.eq.s32.totalorder %s20, 3
    %p143 = por %p141, %p142
    %p144 = scmp.ne.s32.totalorder %s136, %s139
    %p145 = scmp.eq.s32.totalorder %s20, 0
    %p146 = por %p144, %p145
    %p147 = scmp.ne.s32.totalorder %s136, %s139
    %p148 = scmp.eq.s32.totalorder %s25, 3
    %p149 = por %p147, %p148
    %p150 = scmp.ne.s32.totalorder %s139, %s140
    %p151 = scmp.eq.s32.totalorder %s25, 0
    %p152 = por %p150, %p151
    %p153 = scmp.ne.s32.totalorder %s139, %s140
    %p154 = scmp.eq.s32.totalorder %s26, 3
    %p155 = por %p153, %p154
    %p157 = scmp.ne.s32.totalorder %s140, %s156
    %p158 = scmp.eq.s32.totalorder %s26, 0
    %p159 = por %p157, %p158
    %s160 = ssub.s32 %s28, %s35
    %p161 = scmp.eq.s32.totalorder %s160, 0
    %s163 = sadd.s32 %s162, 1
    %s164 = scalar_select %p161, %s162, %s163
    %p167 = pneg %p161
    %p168 = scmp.eq.s32.totalorder %s20, 3
    %p169 = por %p167, %p168
    %p170 = scmp.ne.s32.totalorder %s162, %s165
    %p171 = scmp.eq.s32.totalorder %s20, 0
    %p172 = por %p170, %p171
    %p173 = scmp.ne.s32.totalorder %s162, %s165
    %p174 = scmp.eq.s32.totalorder %s25, 3
    %p175 = por %p173, %p174
    %p176 = scmp.ne.s32.totalorder %s165, %s166
    %p177 = scmp.eq.s32.totalorder %s25, 0
    %p178 = por %p176, %p177
    %p179 = scmp.ne.s32.totalorder %s165, %s166
    %p180 = scmp.eq.s32.totalorder %s26, 3
    %p181 = por %p179, %p180
    %p183 = scmp.ne.s32.totalorder %s166, %s182
    %p184 = scmp.eq.s32.totalorder %s26, 0
    %p185 = por %p183, %p184
    %s186 = ssub.s32 %s28, %s35
    %p187 = scmp.eq.s32.totalorder %s186, 0
    %s189 = sadd.s32 %s188, 1
    %s190 = scalar_select %p187, %s188, %s189
    %p193 = pneg %p187
    %p194 = scmp.eq.s32.totalorder %s20, 3
    %p195 = por %p193, %p194
    %p196 = scmp.ne.s32.totalorder %s188, %s191
    %p197 = scmp.eq.s32.totalorder %s20, 0
    %p198 = por %p196, %p197
    %p199 = scmp.ne.s32.totalorder %s188, %s191
    %p200 = scmp.eq.s32.totalorder %s25, 3
    %p201 = por %p199, %p200
    %p202 = scmp.ne.s32.totalorder %s191, %s192
    %p203 = scmp.eq.s32.totalorder %s25, 0
    %p204 = por %p202, %p203
    %p205 = scmp.ne.s32.totalorder %s191, %s192
    %p206 = scmp.eq.s32.totalorder %s26, 3
    %p207 = por %p205, %p206
    %p209 = scmp.ne.s32.totalorder %s192, %s208
    %p210 = scmp.eq.s32.totalorder %s26, 0
    %p211 = por %p209, %p210
    %s212 = ssub.s32 %s28, %s35
    %p213 = scmp.eq.s32.totalorder %s212, 0
    %s215 = sadd.s32 %s214, 1
    %s216 = scalar_select %p213, %s214, %s215
    %p219 = pneg %p213
    %p220 = scmp.eq.s32.totalorder %s20, 3
    %p221 = por %p219, %p220
    %p222 = scmp.ne.s32.totalorder %s214, %s217
    %p223 = scmp.eq.s32.totalorder %s20, 0
    %p224 = por %p222, %p223
    %p225 = scmp.ne.s32.totalorder %s214, %s217
    %p226 = scmp.eq.s32.totalorder %s25, 3
    %p227 = por %p225, %p226
    %p228 = scmp.ne.s32.totalorder %s217, %s218
    %p229 = scmp.eq.s32.totalorder %s25, 0
    %p230 = por %p228, %p229
    %p231 = scmp.ne.s32.totalorder %s217, %s218
    %p232 = scmp.eq.s32.totalorder %s26, 3
    %p233 = por %p231, %p232
    %p235 = scmp.ne.s32.totalorder %s218, %s234
    %p236 = scmp.eq.s32.totalorder %s26, 0
    %p237 = por %p235, %p236
    %s238 = ssub.s32 %s28, %s35
    %p239 = scmp.eq.s32.totalorder %s238, 0
    %s241 = sadd.s32 %s240, 1
    %s242 = scalar_select %p239, %s240, %s241
    %p245 = pneg %p239
    %p246 = scmp.eq.s32.totalorder %s20, 3
    %p247 = por %p245, %p246
    %p248 = scmp.ne.s32.totalorder %s240, %s243
    %p249 = scmp.eq.s32.totalorder %s20, 0
    %p250 = por %p248, %p249
    %p251 = scmp.ne.s32.totalorder %s240, %s243
    %p252 = scmp.eq.s32.totalorder %s25, 3
    %p253 = por %p251, %p252
    %p254 = scmp.ne.s32.totalorder %s243, %s244
    %p255 = scmp.eq.s32.totalorder %s25, 0
    %p256 = por %p254, %p255
    %p257 = scmp.ne.s32.totalorder %s243, %s244
    %p258 = scmp.eq.s32.totalorder %s26, 3
    %p259 = por %p257, %p258
    %p261 = scmp.ne.s32.totalorder %s244, %s260
    %p262 = scmp.eq.s32.totalorder %s26, 0
    %p263 = por %p261, %p262
    %s264 = ssub.s32 %s28, %s35
    %p265 = scmp.eq.s32.totalorder %s264, 0
    %s267 = sadd.s32 %s266, 1
    %s268 = scalar_select %p265, %s266, %s267
    %p271 = pneg %p265
    %p272 = scmp.eq.s32.totalorder %s20, 3
    %p273 = por %p271, %p272
    %p274 = scmp.ne.s32.totalorder %s266, %s269
    %p275 = scmp.eq.s32.totalorder %s20, 0
    %p276 = por %p274, %p275
    %p277 = scmp.ne.s32.totalorder %s266, %s269
    %p278 = scmp.eq.s32.totalorder %s25, 3
    %p279 = por %p277, %p278
    %p280 = scmp.ne.s32.totalorder %s269, %s270
    %p281 = scmp.eq.s32.totalorder %s25, 0
    %p282 = por %p280, %p281
    %p283 = scmp.ne.s32.totalorder %s269, %s270
    %p284 = scmp.eq.s32.totalorder %s26, 3
    %p285 = por %p283, %p284
    %p287 = scmp.ne.s32.totalorder %s270, %s286
    %p288 = scmp.eq.s32.totalorder %s26, 0
    %p289 = por %p287, %p288
    %s290 = ssub.s32 %s28, %s35
    %p291 = scmp.eq.s32.totalorder %s290, 0
    %s293 = sadd.s32 %s292, 1
    %s294 = scalar_select %p291, %s292, %s293
    %p297 = pneg %p291
    %p298 = scmp.eq.s32.totalorder %s20, 3
    %p299 = por %p297, %p298
    %p300 = scmp.ne.s32.totalorder %s292, %s295
    %p301 = scmp.eq.s32.totalorder %s20, 0
    %p302 = por %p300, %p301
    %p303 = scmp.ne.s32.totalorder %s292, %s295
    %p304 = scmp.eq.s32.totalorder %s25, 3
    %p305 = por %p303, %p304
    %p306 = scmp.ne.s32.totalorder %s295, %s296
    %p307 = scmp.eq.s32.totalorder %s25, 0
    %p308 = por %p306, %p307
    %p309 = scmp.ne.s32.totalorder %s295, %s296
    %p310 = scmp.eq.s32.totalorder %s26, 3
    %p311 = por %p309, %p310
    %p313 = scmp.ne.s32.totalorder %s296, %s312
    %p314 = scmp.eq.s32.totalorder %s26, 0
    %p315 = por %p313, %p314
    %s316 = ssub.s32 %s28, %s35
    %p317 = scmp.eq.s32.totalorder %s316, 0
    %s319 = sadd.s32 %s318, 1
    %s320 = scalar_select %p317, %s318, %s319
    %p323 = pneg %p317
    %p324 = scmp.eq.s32.totalorder %s20, 3
    %p325 = por %p323, %p324
    %p326 = scmp.ne.s32.totalorder %s318, %s321
    %p327 = scmp.eq.s32.totalorder %s20, 0
    %p328 = por %p326, %p327
    %p329 = scmp.ne.s32.totalorder %s318, %s321
    %p330 = scmp.eq.s32.totalorder %s25, 3
    %p331 = por %p329, %p330
    %p332 = scmp.ne.s32.totalorder %s321, %s322
    %p333 = scmp.eq.s32.totalorder %s25, 0
    %p334 = por %p332, %p333
    %p335 = scmp.ne.s32.totalorder %s321, %s322
    %p336 = scmp.eq.s32.totalorder %s26, 3
    %p337 = por %p335, %p336
    %p339 = scmp.ne.s32.totalorder %s322, %s338
    %p340 = scmp.eq.s32.totalorder %s26, 0
    %p341 = por %p339, %p340
    %s342 = ssub.s32 %s28, %s35
    %p343 = scmp.eq.s32.totalorder %s342, 0
    %s345 = sadd.s32 %s344, 1
    %s346 = scalar_select %p343, %s344, %s345
    %p349 = pneg %p343
    %p350 = scmp.eq.s32.totalorder %s20, 3
    %p351 = por %p349, %p350
    %p352 = scmp.ne.s32.totalorder %s344, %s347
    %p353 = scmp.eq.s32.totalorder %s20, 0
    %p354 = por %p352, %p353
    %p355 = scmp.ne.s32.totalorder %s344, %s347
    %p356 = scmp.eq.s32.totalorder %s25, 3
    %p357 = por %p355, %p356
    %p358 = scmp.ne.s32.totalorder %s347, %s348
    %p359 = scmp.eq.s32.totalorder %s25, 0
    %p360 = por %p358, %p359
    %p361 = scmp.ne.s32.totalorder %s347, %s348
    %p362 = scmp.eq.s32.totalorder %s26, 3
    %p363 = por %p361, %p362
    %p365 = scmp.ne.s32.totalorder %s348, %s364
    %p366 = scmp.eq.s32.totalorder %s26, 0
    %p367 = por %p365, %p366
    %s368 = ssub.s32 %s28, %s35
    %p369 = scmp.eq.s32.totalorder %s368, 0
    %s371 = sadd.s32 %s370, 1
    %s372 = scalar_select %p369, %s370, %s371
    %p375 = pneg %p369
    %p376 = scmp.eq.s32.totalorder %s20, 3
    %p377 = por %p375, %p376
    %p378 = scmp.ne.s32.totalorder %s370, %s373
    %p379 = scmp.eq.s32.totalorder %s20, 0
    %p380 = por %p378, %p379
    %p381 = scmp.ne.s32.totalorder %s370, %s373
    %p382 = scmp.eq.s32.totalorder %s25, 3
    %p383 = por %p381, %p382
    %p384 = scmp.ne.s32.totalorder %s373, %s374
    %p385 = scmp.eq.s32.totalorder %s25, 0
    %p386 = por %p384, %p385
    %p387 = scmp.ne.s32.totalorder %s373, %s374
    %p388 = scmp.eq.s32.totalorder %s26, 3
    %p389 = por %p387, %p388
    %p391 = scmp.ne.s32.totalorder %s374, %s390
    %p392 = scmp.eq.s32.totalorder %s26, 0
    %p393 = por %p391, %p392
    %s394 = ssub.s32 %s27, %s39
    %p395 = scmp.eq.s32.totalorder %s394, 0
    %s397 = sadd.s32 %s396, 1
    %s398 = scalar_select %p395, %s396, %s397
    %p401 = pneg %p395
    %p402 = scmp.eq.s32.totalorder %s20, 3
    %p403 = por %p401, %p402
    %p404 = scmp.ne.s32.totalorder %s396, %s399
    %p405 = scmp.eq.s32.totalorder %s20, 0
    %p406 = por %p404, %p405
    %p407 = scmp.ne.s32.totalorder %s396, %s399
    %p408 = scmp.eq.s32.totalorder %s25, 3
    %p409 = por %p407, %p408
    %p410 = scmp.ne.s32.totalorder %s399, %s400
    %p411 = scmp.eq.s32.totalorder %s25, 0
    %p412 = por %p410, %p411
    %p413 = scmp.ne.s32.totalorder %s399, %s400
    %p414 = scmp.eq.s32.totalorder %s26, 3
    %p415 = por %p413, %p414
    %p417 = scmp.ne.s32.totalorder %s400, %s416
    %p418 = scmp.eq.s32.totalorder %s26, 0
    %p419 = por %p417, %p418
    %p420 = scmp.le.s32.totalorder 1, %s20
    %p421 = scmp.lt.s32.totalorder %s20, 5
    %p422 = pnand %p420, %p421
    %p423 = pneg %p422
    // Predicated region
    $region9: #{decoder_forward.2} parent=5 // pred_check
      _
    $region10: #{decoder_forward.2} parent=5 // pred_check_branch
      %425 = sbr.rel (%p422) target = $region12
    $region11: #{decoder_forward.2} parent=5 // pred_region
      %s426 = ssub.s32 %s20, 1
      // Predicated region
      $region13: #{decoder_forward.2} parent=11 // pred_check
        %p427 = pneg %p79
      $region14: #{decoder_forward.2} parent=11 // pred_check_branch
        %429 = sbr.rel (%p427) target = $region16
      $region15: #{decoder_forward.2} parent=11 // pred_region
        _
      $region16: #{decoder_forward.2} parent=11 // pred_fallthru
        _
      // Predicated region
      $region17: #{decoder_forward.2} parent=11 // pred_check
        %p430 = pneg %p100
      $region18: #{decoder_forward.2} parent=11 // pred_check_branch
        %432 = sbr.rel (%p430) target = $region20
      $region19: #{decoder_forward.2} parent=11 // pred_region
        _
      $region20: #{decoder_forward.2} parent=11 // pred_fallthru
        _
    $region12: #{decoder_forward.2} parent=5 // pred_fallthru
      _
    %p433 = scmp.lt.s32.totalorder %s20, 4
    // Predicated region
    $region21: #{decoder_forward.2} parent=5 // pred_check
      %p434 = pneg %p433
    $region22: #{decoder_forward.2} parent=5 // pred_check_branch
      %436 = sbr.rel (%p434) target = $region24
    $region23: #{decoder_forward.2} parent=5 // pred_region
      // Predicated region
      $region25: #{decoder_forward.2} parent=23 // pred_check
        %p437 = pneg %p52
      $region26: #{decoder_forward.2} parent=23 // pred_check_branch
        %439 = sbr.rel (%p437) target = $region28
      $region27: #{decoder_forward.2} parent=23 // pred_region
        %p440 = scmp.lt.s32.totalorder %s27, 1
        %s441 = scalar_select %p440, %s27, 1
        %s442 = smul.addr %s441, 2
        %s443 = smul.addr %s442, 8
        %s444 = scalar_lea.vmem %s0, %s443
      $region28: #{decoder_forward.2} parent=23 // pred_fallthru
        _
      // Predicated region
      $region29: #{decoder_forward.2} parent=23 // pred_check
        %p445 = pneg %p120
      $region30: #{decoder_forward.2} parent=23 // pred_check_branch
        %447 = sbr.rel (%p445) target = $region32
      $region31: #{decoder_forward.2} parent=23 // pred_region
        %p448 = scmp.lt.s32.totalorder %s27, 1
        %s449 = scalar_select %p448, %s27, 1
        %s450 = smul.addr %s449, 2
        %s451 = smul.addr %s450, 8
        %s452 = scalar_lea.vmem %s3, %s451
      $region32: #{decoder_forward.2} parent=23 // pred_fallthru
        _
      // Predicated region
      $region33: #{decoder_forward.2} parent=23 // pred_check
        %p453 = pneg %p146
      $region34: #{decoder_forward.2} parent=23 // pred_check_branch
        %455 = sbr.rel (%p453) target = $region36
      $region35: #{decoder_forward.2} parent=23 // pred_region
        %p456 = scmp.lt.s32.totalorder %s28, 1
        %s457 = scalar_select %p456, %s28, 1
        %s458 = smul.addr %s457, 4
        %s459 = smul.addr %s458, 4
        %s460 = scalar_lea.vmem %s4, %s459
      $region36: #{decoder_forward.2} parent=23 // pred_fallthru
        _
      // Predicated region
      $region37: #{decoder_forward.2} parent=23 // pred_check
        %p461 = pneg %p172
      $region38: #{decoder_forward.2} parent=23 // pred_check_branch
        %463 = sbr.rel (%p461) target = $region40
      $region39: #{decoder_forward.2} parent=23 // pred_region
        %p464 = scmp.lt.s32.totalorder %s28, 1
        %s465 = scalar_select %p464, %s28, 1
        %s466 = scalar_lea.vmem %s5, %s465
      $region40: #{decoder_forward.2} parent=23 // pred_fallthru
        _
      // Predicated region
      $region41: #{decoder_forward.2} parent=23 // pred_check
        %p467 = pneg %p198
      $region42: #{decoder_forward.2} parent=23 // pred_check_branch
        %469 = sbr.rel (%p467) target = $region44
      $region43: #{decoder_forward.2} parent=23 // pred_region
        %p470 = scmp.lt.s32.totalorder %s28, 1
        %s471 = scalar_select %p470, %s28, 1
        %s472 = scalar_lea.vmem %s6, %s471
      $region44: #{decoder_forward.2} parent=23 // pred_fallthru
        _
      // Predicated region
      $region45: #{decoder_forward.2} parent=23 // pred_check
        %p473 = pneg %p224
      $region46: #{decoder_forward.2} parent=23 // pred_check_branch
        %475 = sbr.rel (%p473) target = $region48
      $region47: #{decoder_forward.2} parent=23 // pred_region
        %p476 = scmp.lt.s32.totalorder %s28, 1
        %s477 = scalar_select %p476, %s28, 1
        %s478 = scalar_lea.vmem %s7, %s477
      $region48: #{decoder_forward.2} parent=23 // pred_fallthru
        _
      // Predicated region
      $region49: #{decoder_forward.2} parent=23 // pred_check
        %p479 = pneg %p250
      $region50: #{decoder_forward.2} parent=23 // pred_check_branch
        %481 = sbr.rel (%p479) target = $region52
      $region51: #{decoder_forward.2} parent=23 // pred_region
        %p482 = scmp.lt.s32.totalorder %s28, 1
        %s483 = scalar_select %p482, %s28, 1
        %s484 = smul.addr %s483, 4
        %s485 = smul.addr %s484, 4
        %s486 = scalar_lea.vmem %s8, %s485
      $region52: #{decoder_forward.2} parent=23 // pred_fallthru
        _
      // Predicated region
      $region53: #{decoder_forward.2} parent=23 // pred_check
        %p487 = pneg %p276
      $region54: #{decoder_forward.2} parent=23 // pred_check_branch
        %489 = sbr.rel (%p487) target = $region56
      $region55: #{decoder_forward.2} parent=23 // pred_region
        %p490 = scmp.lt.s32.totalorder %s28, 1
        %s491 = scalar_select %p490, %s28, 1
        %s492 = scalar_lea.vmem %s9, %s491
      $region56: #{decoder_forward.2} parent=23 // pred_fallthru
        _
      // Predicated region
      $region57: #{decoder_forward.2} parent=23 // pred_check
        %p493 = pneg %p302
      $region58: #{decoder_forward.2} parent=23 // pred_check_branch
        %495 = sbr.rel (%p493) target = $region60
      $region59: #{decoder_forward.2} parent=23 // pred_region
        %p496 = scmp.lt.s32.totalorder %s28, 1
        %s497 = scalar_select %p496, %s28, 1
        %s498 = smul.addr %s497, 8
        %s499 = smul.addr %s498, 4
        %s500 = scalar_lea.vmem %s10, %s499
      $region60: #{decoder_forward.2} parent=23 // pred_fallthru
        _
      // Predicated region
      $region61: #{decoder_forward.2} parent=23 // pred_check
        %p501 = pneg %p328
      $region62: #{decoder_forward.2} parent=23 // pred_check_branch
        %503 = sbr.rel (%p501) target = $region64
      $region63: #{decoder_forward.2} parent=23 // pred_region
        %p504 = scmp.lt.s32.totalorder %s28, 1
        %s505 = scalar_select %p504, %s28, 1
        %s506 = scalar_lea.vmem %s11, %s505
      $region64: #{decoder_forward.2} parent=23 // pred_fallthru
        _
      // Predicated region
      $region65: #{decoder_forward.2} parent=23 // pred_check
        %p507 = pneg %p354
      $region66: #{decoder_forward.2} parent=23 // pred_check_branch
        %509 = sbr.rel (%p507) target = $region68
      $region67: #{decoder_forward.2} parent=23 // pred_region
        %p510 = scmp.lt.s32.totalorder %s28, 1
        %s511 = scalar_select %p510, %s28, 1
        %s512 = scalar_lea.vmem %s12, %s511
      $region68: #{decoder_forward.2} parent=23 // pred_fallthru
        _
      // Predicated region
      $region69: #{decoder_forward.2} parent=23 // pred_check
        %p513 = pneg %p380
      $region70: #{decoder_forward.2} parent=23 // pred_check_branch
        %515 = sbr.rel (%p513) target = $region72
      $region71: #{decoder_forward.2} parent=23 // pred_region
        %p516 = scmp.lt.s32.totalorder %s28, 1
        %s517 = scalar_select %p516, %s28, 1
        %s518 = scalar_lea.vmem %s13, %s517
      $region72: #{decoder_forward.2} parent=23 // pred_fallthru
        _
    $region24: #{decoder_forward.2} parent=5 // pred_fallthru
      _
    %p519 = scmp.le.s32.totalorder 1, %s20
    %p520 = scmp.lt.s32.totalorder %s20, 5
    %p521 = pnand %p519, %p520
    %p522 = pneg %p521
    // Predicated region
    $region73: #{decoder_forward.2} parent=5 // pred_check
      _
    $region74: #{decoder_forward.2} parent=5 // pred_check_branch
      %524 = sbr.rel (%p521) target = $region76
    $region75: #{decoder_forward.2} parent=5 // pred_region
      %s525 = ssub.s32 %s20, 1
      %p526 = scmp.lt.s32.totalorder %s29, 1
      %s527 = scalar_select %p526, %s29, 1
      %s528 = smul.addr %s527, 2
      %s529 = smul.addr %s528, 8
      %s530 = scalar_lea.vmem %s0, %s529
      %p531 = pneg %p58
      %p532 = pneg %p55
      %p533 = pneg %p79
      %p534 = pneg %p76
      %p535 = pneg %p100
      %p536 = pneg %p97
      %p537 = scmp.lt.s32.totalorder %s29, 1
      %s538 = scalar_select %p537, %s29, 1
      %s539 = smul.addr %s538, 2
      %s540 = smul.addr %s539, 8
      %s541 = scalar_lea.vmem %s3, %s540
      %p542 = pneg %p126
      %p543 = pneg %p123
      %p544 = scmp.lt.s32.totalorder %s30, 1
      %s545 = scalar_select %p544, %s30, 1
      %s546 = smul.addr %s545, 4
      %s547 = smul.addr %s546, 4
      %s548 = scalar_lea.vmem %s4, %s547
      %p549 = pneg %p152
      %p550 = pneg %p149
      %p551 = scmp.lt.s32.totalorder %s30, 1
      %s552 = scalar_select %p551, %s30, 1
      %s553 = scalar_lea.vmem %s5, %s552
      %p554 = pneg %p178
      %p555 = pneg %p175
      %p556 = scmp.lt.s32.totalorder %s30, 1
      %s557 = scalar_select %p556, %s30, 1
      %s558 = scalar_lea.vmem %s6, %s557
      %p559 = pneg %p204
      %p560 = pneg %p201
      %p561 = scmp.lt.s32.totalorder %s30, 1
      %s562 = scalar_select %p561, %s30, 1
      %s563 = scalar_lea.vmem %s7, %s562
      %p564 = pneg %p230
      %p565 = pneg %p227
      %p566 = scmp.lt.s32.totalorder %s30, 1
      %s567 = scalar_select %p566, %s30, 1
      %s568 = smul.addr %s567, 4
      %s569 = smul.addr %s568, 4
      %s570 = scalar_lea.vmem %s8, %s569
      %p571 = pneg %p256
      %p572 = pneg %p253
      %p573 = scmp.lt.s32.totalorder %s30, 1
      %s574 = scalar_select %p573, %s30, 1
      %s575 = scalar_lea.vmem %s9, %s574
      %p576 = pneg %p282
      %p577 = pneg %p279
      %p578 = scmp.lt.s32.totalorder %s30, 1
      %s579 = scalar_select %p578, %s30, 1
      %s580 = smul.addr %s579, 8
      %s581 = smul.addr %s580, 4
      %s582 = scalar_lea.vmem %s10, %s581
      %p583 = pneg %p308
      %p584 = pneg %p305
      %p585 = scmp.lt.s32.totalorder %s30, 1
      %s586 = scalar_select %p585, %s30, 1
      %s587 = scalar_lea.vmem %s11, %s586
      %p588 = pneg %p334
      %p589 = pneg %p331
      %p590 = scmp.lt.s32.totalorder %s30, 1
      %s591 = scalar_select %p590, %s30, 1
      %s592 = scalar_lea.vmem %s12, %s591
      %p593 = pneg %p360
      %p594 = pneg %p357
      %p595 = scmp.lt.s32.totalorder %s30, 1
      %s596 = scalar_select %p595, %s30, 1
      %s597 = scalar_lea.vmem %s13, %s596
      %p598 = pneg %p386
      %p599 = pneg %p383
      %p600 = pneg %p412
      %p601 = pneg %p409
      %p602 = scmp.lt.s32.totalorder %s29, 1
      %s603 = scalar_select %p602, %s29, 1
      %s604 = smul.addr %s603, 2
      %s605 = smul.addr %s604, 8
      %s606 = scalar_lea.vmem %s14, %s605
      %p607 = scmp.lt.s32.totalorder %s29, 1
      %s608 = scalar_select %p607, %s29, 1
      %s609 = smul.addr %s608, 2
      %s610 = smul.addr %s609, 8
      %s611 = scalar_lea.vmem %s0, %s610
      %p612 = scmp.lt.s32.totalorder %s29, 1
      %s613 = scalar_select %p612, %s29, 1
      %s614 = smul.addr %s613, 2
      %s615 = smul.addr %s614, 8
      %s616 = scalar_lea.vmem %s3, %s615
      %p617 = scmp.lt.s32.totalorder %s30, 1
      %s618 = scalar_select %p617, %s30, 1
      %s619 = smul.addr %s618, 4
      %s620 = smul.addr %s619, 4
      %s621 = scalar_lea.vmem %s4, %s620
      %p622 = scmp.lt.s32.totalorder %s30, 1
      %s623 = scalar_select %p622, %s30, 1
      %s624 = scalar_lea.vmem %s5, %s623
      %p625 = scmp.lt.s32.totalorder %s30, 1
      %s626 = scalar_select %p625, %s30, 1
      %s627 = scalar_lea.vmem %s6, %s626
      %p628 = scmp.lt.s32.totalorder %s30, 1
      %s629 = scalar_select %p628, %s30, 1
      %s630 = scalar_lea.vmem %s7, %s629
      %p631 = scmp.lt.s32.totalorder %s30, 1
      %s632 = scalar_select %p631, %s30, 1
      %s633 = smul.addr %s632, 4
      %s634 = smul.addr %s633, 4
      %s635 = scalar_lea.vmem %s8, %s634
      %p636 = scmp.lt.s32.totalorder %s30, 1
      %s637 = scalar_select %p636, %s30, 1
      %s638 = scalar_lea.vmem %s9, %s637
      %p639 = scmp.lt.s32.totalorder %s30, 1
      %s640 = scalar_select %p639, %s30, 1
      %s641 = smul.addr %s640, 8
      %s642 = smul.addr %s641, 4
      %s643 = scalar_lea.vmem %s10, %s642
      %p644 = scmp.lt.s32.totalorder %s30, 1
      %s645 = scalar_select %p644, %s30, 1
      %s646 = scalar_lea.vmem %s11, %s645
      %p647 = scmp.lt.s32.totalorder %s30, 1
      %s648 = scalar_select %p647, %s30, 1
      %s649 = scalar_lea.vmem %s12, %s648
      %p650 = scmp.lt.s32.totalorder %s30, 1
      %s651 = scalar_select %p650, %s30, 1
      %s652 = scalar_lea.vmem %s13, %s651
      %p653 = scmp.lt.s32.totalorder %s29, 1
      %s654 = scalar_select %p653, %s29, 1
      %s655 = smul.addr %s654, 2
      %s656 = smul.addr %s655, 8
      %s657 = scalar_lea.vmem %s14, %s656
      %p659 = scmp.eq.s32.totalorder %s30, 0
      // Predicated region
      $region77: #{decoder_forward.2} parent=75 // pred_check
        %p660 = pneg %p659
      $region78: #{decoder_forward.2} parent=75 // pred_check_branch
        %662 = sbr.rel (%p660) target = $region80
      $region79: #{decoder_forward.2} parent=75 // pred_region
        %v663 = vld [vmem:[%s611] sm:$0xff]
        %v664 = vld [vmem:[%s611 + $0x8] sm:$0xff]
        %vm665 = vcmask 261120
        %666 = vst.msk [vmem:[#allocation2] sm:$0xff] %vm665, %v663
        %667 = vst.msk [vmem:[#allocation2 + $0x8] sm:$0xff] %vm665, %v664
      $region80: #{decoder_forward.2} parent=75 // pred_fallthru
        _
      %v668 = vld [vmem:[#allocation2] sm:$0xff]
      %v669 = vld [vmem:[#allocation2 + $0x8] sm:$0xff]
      %v670 = vld [vmem:[%s2] sm:$0x3]
      %v671 = vld [vmem:[%s616] sm:$0xff]
      %v672 = vld [vmem:[%s616 + $0x8] sm:$0xff]
      %v673 = vmul.f32 %v668, 0.35355338
      %v674 = vmul.f32 %v669, 0.35355338
      %v675 = vpack.c.bf16 %v674, %v673
      %v676 = vld [vmem:[%s1] sm:$0xf]
      %v677 = vlaneseq
      %v678 = vshrl.u32 %v677, 7
      %v679 = vsub.s32 0, %v678
      %v680 = vrot.slane %v670, %v679
      %vm681 = vcmask 64512
      %v683 = vsel %vm681, %v675, 0
      %v686 = vsel %vm681, %v676, 0
      %688 = vmatprep.subr.bf16.mxu0 0
      %689 = vmatpush1.bf16.xpose.msra.mxu0 %v686
      %690 = vmatprep.subr.bf16.mxu0 0
      %691 = vmatpush1.bf16.xpose.msra.mxu0 0
      %692 = vmatprep.subr.bf16.mxu0 0
      %693 = vmatpush1.bf16.xpose.msra.mxu0 0
      %694 = vmatprep.subr.bf16.mxu0 0
      %695 = vmatpush1.bf16.xpose.msra.mxu0 0
      %696 = vmatprep.subr.bf16.mxu0 0
      %697 = vmatpush1.bf16.xpose.msra.mxu0 0
      %698 = vmatprep.subr.bf16.mxu0 0
      %699 = vmatpush1.bf16.xpose.msra.mxu0 0
      %700 = vmatprep.subr.bf16.mxu0 0
      %701 = vmatpush1.bf16.xpose.msra.mxu0 0
      %702 = vmatprep.subr.bf16.mxu0 0
      %703 = vmatpush1.bf16.xpose.msra.mxu0 0
      %704 = vmatprep.subr.bf16.mxu0 0
      %705 = vmatpush1.bf16.xpose.msra.mxu0 0
      %706 = vmatprep.subr.bf16.mxu0 0
      %707 = vmatpush1.bf16.xpose.msra.mxu0 0
      %708 = vmatprep.subr.bf16.mxu0 0
      %709 = vmatpush1.bf16.xpose.msra.mxu0 0
      %710 = vmatprep.subr.bf16.mxu0 0
      %711 = vmatpush1.bf16.xpose.msra.mxu0 0
      %712 = vmatprep.subr.bf16.mxu0 0
      %713 = vmatpush1.bf16.xpose.msra.mxu0 0
      %714 = vmatprep.subr.bf16.mxu0 0
      %715 = vmatpush1.bf16.xpose.msra.mxu0 0
      %716 = vmatprep.subr.bf16.mxu0 0
      %717 = vmatpush1.bf16.xpose.msra.mxu0 0
      %718 = vmatprep.subr.bf16.mxu0 0
      %719 = vmatpush1.bf16.xpose.msra.mxu0 0
      %720 = vmatprep.mubr.bf16.mxu0 0
      %721 = vmatmul.mubr.bf16.gmra.mrb[0].mxu0 %v683
      %v722 = vpop.f32.mrb[0].mxu0
      %v723 = vadd.f32 %v680, %v722
      %v724 = vpop.f32.mrb[0].mxu0
      %v725 = vpop.f32.mrb[0].mxu0
      %v726 = vpop.f32.mrb[0].mxu0
      %727 = vdwg.mxu0
      %v728 = vsel %vm681, %v723, -inf
      %729 = vmax.xlane.f32.xlu0 %v728
      %v730 = vpop.xlane.xlu0 %729
      %v731 = vsub.f32 %v723, %v730
      %v732 = vmul.f32 %v731, 1.442695
      %v733 = vpow.pop %v732
      %v734 = vsel %vm681, %v733, 0.0
      %735 = vadd.xlane.f32.xlu0 %v734
      %v736 = vpop.xlane.xlu0 %735
      %v737 = vrcp.pop %v736
      %v738 = vmul.f32 %v733, %v737
      %v739 = vpack.c.bf16 %v738, %v738
      %v741 = vsel %vm681, %v739, 0
      %vm743 = vcmask 1043456
      %v744 = vsel %vm743, %v676, 0
      %746 = vmatprep.subr.bf16.mxu0 0
      %747 = vmatpush1.bf16.msra.mxu0 %v744
      %748 = vmatprep.subr.bf16.mxu0 0
      %749 = vmatpush1.bf16.msra.mxu0 0
      %750 = vmatprep.subr.bf16.mxu0 0
      %751 = vmatpush1.bf16.msra.mxu0 0
      %752 = vmatprep.subr.bf16.mxu0 0
      %753 = vmatpush1.bf16.msra.mxu0 0
      %754 = vmatprep.subr.bf16.mxu0 0
      %755 = vmatpush1.bf16.msra.mxu0 0
      %756 = vmatprep.subr.bf16.mxu0 0
      %757 = vmatpush1.bf16.msra.mxu0 0
      %758 = vmatprep.subr.bf16.mxu0 0
      %759 = vmatpush1.bf16.msra.mxu0 0
      %760 = vmatprep.subr.bf16.mxu0 0
      %761 = vmatpush1.bf16.msra.mxu0 0
      %762 = vmatprep.subr.bf16.mxu0 0
      %763 = vmatpush1.bf16.msra.mxu0 0
      %764 = vmatprep.subr.bf16.mxu0 0
      %765 = vmatpush1.bf16.msra.mxu0 0
      %766 = vmatprep.subr.bf16.mxu0 0
      %767 = vmatpush1.bf16.msra.mxu0 0
      %768 = vmatprep.subr.bf16.mxu0 0
      %769 = vmatpush1.bf16.msra.mxu0 0
      %770 = vmatprep.subr.bf16.mxu0 0
      %771 = vmatpush1.bf16.msra.mxu0 0
      %772 = vmatprep.subr.bf16.mxu0 0
      %773 = vmatpush1.bf16.msra.mxu0 0
      %774 = vmatprep.subr.bf16.mxu0 0
      %775 = vmatpush1.bf16.msra.mxu0 0
      %776 = vmatprep.subr.bf16.mxu0 0
      %777 = vmatpush1.bf16.msra.mxu0 0
      %778 = vmatprep.mubr.bf16.mxu0 0
      %779 = vmatmul.mubr.bf16.gmra.mrb[0].mxu0 %v741
      %v780 = vpop.f32.mrb[0].mxu0
      %v781 = vadd.f32 0.0, %v780
      %v782 = vpop.f32.mrb[0].mxu0
      %v783 = vpop.f32.mrb[0].mxu0
      %v784 = vpop.f32.mrb[0].mxu0
      %785 = vdwg.mxu0
      %786 = vst.msk [vmem:[#allocation3] sm:$0xff] %vm681, %v781
      %v787 = vld [vmem:[%s1] sm:$0xf]
      %789 = vrot.lane.b32.xlu0 %v675, 112
      %v790 = vpop.permute.xlu0 %789
      %v792 = vunpack.c.l.b16 %v787
      %v793 = vpack.c.b16 %v792, %v792
      %794 = vrot.lane.b32.xlu0 %v793, 112
      %v795 = vpop.permute.xlu0 %794
      %v797 = vsel %vm681, %v790, 0
      %v800 = vsel %vm681, %v795, 0
      %802 = vmatprep.subr.bf16.mxu0 0
      %803 = vmatpush1.bf16.xpose.msra.mxu0 %v800
      %804 = vmatprep.subr.bf16.mxu0 0
      %805 = vmatpush1.bf16.xpose.msra.mxu0 0
      %806 = vmatprep.subr.bf16.mxu0 0
      %807 = vmatpush1.bf16.xpose.msra.mxu0 0
      %808 = vmatprep.subr.bf16.mxu0 0
      %809 = vmatpush1.bf16.xpose.msra.mxu0 0
      %810 = vmatprep.subr.bf16.mxu0 0
      %811 = vmatpush1.bf16.xpose.msra.mxu0 0
      %812 = vmatprep.subr.bf16.mxu0 0
      %813 = vmatpush1.bf16.xpose.msra.mxu0 0
      %814 = vmatprep.subr.bf16.mxu0 0
      %815 = vmatpush1.bf16.xpose.msra.mxu0 0
      %816 = vmatprep.subr.bf16.mxu0 0
      %817 = vmatpush1.bf16.xpose.msra.mxu0 0
      %818 = vmatprep.subr.bf16.mxu0 0
      %819 = vmatpush1.bf16.xpose.msra.mxu0 0
      %820 = vmatprep.subr.bf16.mxu0 0
      %821 = vmatpush1.bf16.xpose.msra.mxu0 0
      %822 = vmatprep.subr.bf16.mxu0 0
      %823 = vmatpush1.bf16.xpose.msra.mxu0 0
      %824 = vmatprep.subr.bf16.mxu0 0
      %825 = vmatpush1.bf16.xpose.msra.mxu0 0
      %826 = vmatprep.subr.bf16.mxu0 0
      %827 = vmatpush1.bf16.xpose.msra.mxu0 0
      %828 = vmatprep.subr.bf16.mxu0 0
      %829 = vmatpush1.bf16.xpose.msra.mxu0 0
      %830 = vmatprep.subr.bf16.mxu0 0
      %831 = vmatpush1.bf16.xpose.msra.mxu0 0
      %832 = vmatprep.subr.bf16.mxu0 0
      %833 = vmatpush1.bf16.xpose.msra.mxu0 0
      %834 = vmatprep.mubr.bf16.mxu0 0
      %835 = vmatmul.mubr.bf16.gmra.mrb[0].mxu0 %v797
      %v836 = vpop.f32.mrb[0].mxu0
      %v837 = vadd.f32 %v680, %v836
      %v838 = vpop.f32.mrb[0].mxu0
      %v839 = vpop.f32.mrb[0].mxu0
      %v840 = vpop.f32.mrb[0].mxu0
      %841 = vdwg.mxu0
      %v842 = vsel %vm681, %v837, -inf
      %843 = vmax.xlane.f32.xlu0 %v842
      %v844 = vpop.xlane.xlu0 %843
      %v845 = vsub.f32 %v837, %v844
      %v846 = vmul.f32 %v845, 1.442695
      %v847 = vpow.pop %v846
      %v848 = vsel %vm681, %v847, 0.0
      %849 = vadd.xlane.f32.xlu0 %v848
      %v850 = vpop.xlane.xlu0 %849
      %v851 = vrcp.pop %v850
      %v852 = vmul.f32 %v847, %v851
      %v853 = vpack.c.bf16 %v852, %v852
      %v855 = vsel %vm681, %v853, 0
      %v857 = vsel %vm743, %v795, 0
      %859 = vmatprep.subr.bf16.mxu0 0
      %860 = vmatpush1.bf16.msra.mxu0 %v857
      %861 = vmatprep.subr.bf16.mxu0 0
      %862 = vmatpush1.bf16.msra.mxu0 0
      %863 = vmatprep.subr.bf16.mxu0 0
      %864 = vmatpush1.bf16.msra.mxu0 0
      %865 = vmatprep.subr.bf16.mxu0 0
      %866 = vmatpush1.bf16.msra.mxu0 0
      %867 = vmatprep.subr.bf16.mxu0 0
      %868 = vmatpush1.bf16.msra.mxu0 0
      %869 = vmatprep.subr.bf16.mxu0 0
      %870 = vmatpush1.bf16.msra.mxu0 0
      %871 = vmatprep.subr.bf16.mxu0 0
      %872 = vmatpush1.bf16.msra.mxu0 0
      %873 = vmatprep.subr.bf16.mxu0 0
      %874 = vmatpush1.bf16.msra.mxu0 0
      %875 = vmatprep.subr.bf16.mxu0 0
      %876 = vmatpush1.bf16.msra.mxu0 0
      %877 = vmatprep.subr.bf16.mxu0 0
      %878 = vmatpush1.bf16.msra.mxu0 0
      %879 = vmatprep.subr.bf16.mxu0 0
      %880 = vmatpush1.bf16.msra.mxu0 0
      %881 = vmatprep.subr.bf16.mxu0 0
      %882 = vmatpush1.bf16.msra.mxu0 0
      %883 = vmatprep.subr.bf16.mxu0 0
      %884 = vmatpush1.bf16.msra.mxu0 0
      %885 = vmatprep.subr.bf16.mxu0 0
      %886 = vmatpush1.bf16.msra.mxu0 0
      %887 = vmatprep.subr.bf16.mxu0 0
      %888 = vmatpush1.bf16.msra.mxu0 0
      %889 = vmatprep.subr.bf16.mxu0 0
      %890 = vmatpush1.bf16.msra.mxu0 0
      %891 = vmatprep.mubr.bf16.mxu0 0
      %892 = vmatmul.mubr.bf16.gmra.mrb[0].mxu0 %v855
      %v893 = vpop.f32.mrb[0].mxu0
      %v894 = vadd.f32 0.0, %v893
      %v895 = vpop.f32.mrb[0].mxu0
      %v896 = vpop.f32.mrb[0].mxu0
      %v897 = vpop.f32.mrb[0].mxu0
      %898 = vdwg.mxu0
      %900 = vrot.lane.b32.xlu0 %v894, 8
      %v901 = vpop.permute.xlu0 %900
      %vm903 = vcmask 130112
      %904 = vst.msk [vmem:[#allocation3] sm:$0xff] %vm903, %v901
      %v905 = vld [vmem:[%s1 + $0x4] sm:$0xf]
      %v906 = vrot.slane %v675, 4
      %v908 = vsel %vm681, %v906, 0
      %v911 = vsel %vm681, %v905, 0
      %913 = vmatprep.subr.bf16.mxu0 0
      %914 = vmatpush1.bf16.xpose.msra.mxu0 %v911
      %915 = vmatprep.subr.bf16.mxu0 0
      %916 = vmatpush1.bf16.xpose.msra.mxu0 0
      %917 = vmatprep.subr.bf16.mxu0 0
      %918 = vmatpush1.bf16.xpose.msra.mxu0 0
      %919 = vmatprep.subr.bf16.mxu0 0
      %920 = vmatpush1.bf16.xpose.msra.mxu0 0
      %921 = vmatprep.subr.bf16.mxu0 0
      %922 = vmatpush1.bf16.xpose.msra.mxu0 0
      %923 = vmatprep.subr.bf16.mxu0 0
      %924 = vmatpush1.bf16.xpose.msra.mxu0 0
      %925 = vmatprep.subr.bf16.mxu0 0
      %926 = vmatpush1.bf16.xpose.msra.mxu0 0
      %927 = vmatprep.subr.bf16.mxu0 0
      %928 = vmatpush1.bf16.xpose.msra.mxu0 0
      %929 = vmatprep.subr.bf16.mxu0 0
      %930 = vmatpush1.bf16.xpose.msra.mxu0 0
      %931 = vmatprep.subr.bf16.mxu0 0
      %932 = vmatpush1.bf16.xpose.msra.mxu0 0
      %933 = vmatprep.subr.bf16.mxu0 0
      %934 = vmatpush1.bf16.xpose.msra.mxu0 0
      %935 = vmatprep.subr.bf16.mxu0 0
      %936 = vmatpush1.bf16.xpose.msra.mxu0 0
      %937 = vmatprep.subr.bf16.mxu0 0
      %938 = vmatpush1.bf16.xpose.msra.mxu0 0
      %939 = vmatprep.subr.bf16.mxu0 0
      %940 = vmatpush1.bf16.xpose.msra.mxu0 0
      %941 = vmatprep.subr.bf16.mxu0 0
      %942 = vmatpush1.bf16.xpose.msra.mxu0 0
      %943 = vmatprep.subr.bf16.mxu0 0
      %944 = vmatpush1.bf16.xpose.msra.mxu0 0
      %945 = vmatprep.mubr.bf16.mxu0 0
      %946 = vmatmul.mubr.bf16.gmra.mrb[0].mxu0 %v908
      %v947 = vpop.f32.mrb[0].mxu0
      %v948 = vadd.f32 %v680, %v947
      %v949 = vpop.f32.mrb[0].mxu0
      %v950 = vpop.f32.mrb[0].mxu0
      %v951 = vpop.f32.mrb[0].mxu0
      %952 = vdwg.mxu0
      %v953 = vsel %vm681, %v948, -inf
      %954 = vmax.xlane.f32.xlu0 %v953
      %v955 = vpop.xlane.xlu0 %954
      %v956 = vsub.f32 %v948, %v955
      %v957 = vmul.f32 %v956, 1.442695
      %v958 = vpow.pop %v957
      %v959 = vsel %vm681, %v958, 0.0
      %960 = vadd.xlane.f32.xlu0 %v959
      %v961 = vpop.xlane.xlu0 %960
      %v962 = vrcp.pop %v961
      %v963 = vmul.f32 %v958, %v962
      %v964 = vpack.c.bf16 %v963, %v963
      %v966 = vsel %vm681, %v964, 0
      %v968 = vsel %vm743, %v905, 0
      %970 = vmatprep.subr.bf16.mxu0 0
      %971 = vmatpush1.bf16.msra.mxu0 %v968
      %972 = vmatprep.subr.bf16.mxu0 0
      %973 = vmatpush1.bf16.msra.mxu0 0
      %974 = vmatprep.subr.bf16.mxu0 0
      %975 = vmatpush1.bf16.msra.mxu0 0
      %976 = vmatprep.subr.bf16.mxu0 0
      %977 = vmatpush1.bf16.msra.mxu0 0
      %978 = vmatprep.subr.bf16.mxu0 0
      %979 = vmatpush1.bf16.msra.mxu0 0
      %980 = vmatprep.subr.bf16.mxu0 0
      %981 = vmatpush1.bf16.msra.mxu0 0
      %982 = vmatprep.subr.bf16.mxu0 0
      %983 = vmatpush1.bf16.msra.mxu0 0
      %984 = vmatprep.subr.bf16.mxu0 0
      %985 = vmatpush1.bf16.msra.mxu0 0
      %986 = vmatprep.subr.bf16.mxu0 0
      %987 = vmatpush1.bf16.msra.mxu0 0
      %988 = vmatprep.subr.bf16.mxu0 0
      %989 = vmatpush1.bf16.msra.mxu0 0
      %990 = vmatprep.subr.bf16.mxu0 0
      %991 = vmatpush1.bf16.msra.mxu0 0
      %992 = vmatprep.subr.bf16.mxu0 0
      %993 = vmatpush1.bf16.msra.mxu0 0
      %994 = vmatprep.subr.bf16.mxu0 0
      %995 = vmatpush1.bf16.msra.mxu0 0
      %996 = vmatprep.subr.bf16.mxu0 0
      %997 = vmatpush1.bf16.msra.mxu0 0
      %998 = vmatprep.subr.bf16.mxu0 0
      %999 = vmatpush1.bf16.msra.mxu0 0
      %1000 = vmatprep.subr.bf16.mxu0 0
      %1001 = vmatpush1.bf16.msra.mxu0 0
      %1002 = vmatprep.mubr.bf16.mxu0 0
      %1003 = vmatmul.mubr.bf16.gmra.mrb[0].mxu0 %v966
      %v1004 = vpop.f32.mrb[0].mxu0
      %v1005 = vadd.f32 0.0, %v1004
      %v1006 = vpop.f32.mrb[0].mxu0
      %v1007 = vpop.f32.mrb[0].mxu0
      %v1008 = vpop.f32.mrb[0].mxu0
      %1009 = vdwg.mxu0
      %1011 = vrot.lane.b32.xlu0 %v1005, 16
      %v1012 = vpop.permute.xlu0 %1011
      %vm1014 = vcmask 195712
      %1015 = vst.msk [vmem:[#allocation3] sm:$0xff] %vm1014, %v1012
      %v1016 = vld [vmem:[%s1 + $0x4] sm:$0xf]
      %1017 = vrot.lane.b32.xlu0 %v906, 112
      %v1018 = vpop.permute.xlu0 %1017
      %v1020 = vunpack.c.l.b16 %v1016
      %v1021 = vpack.c.b16 %v1020, %v1020
      %1022 = vrot.lane.b32.xlu0 %v1021, 112
      %v1023 = vpop.permute.xlu0 %1022
      %v1025 = vsel %vm681, %v1018, 0
      %v1028 = vsel %vm681, %v1023, 0
      %1030 = vmatprep.subr.bf16.mxu0 0
      %1031 = vmatpush1.bf16.xpose.msra.mxu0 %v1028
      %1032 = vmatprep.subr.bf16.mxu0 0
      %1033 = vmatpush1.bf16.xpose.msra.mxu0 0
      %1034 = vmatprep.subr.bf16.mxu0 0
      %1035 = vmatpush1.bf16.xpose.msra.mxu0 0
      %1036 = vmatprep.subr.bf16.mxu0 0
      %1037 = vmatpush1.bf16.xpose.msra.mxu0 0
      %1038 = vmatprep.subr.bf16.mxu0 0
      %1039 = vmatpush1.bf16.xpose.msra.mxu0 0
      %1040 = vmatprep.subr.bf16.mxu0 0
      %1041 = vmatpush1.bf16.xpose.msra.mxu0 0
      %1042 = vmatprep.subr.bf16.mxu0 0
      %1043 = vmatpush1.bf16.xpose.msra.mxu0 0
      %1044 = vmatprep.subr.bf16.mxu0 0
      %1045 = vmatpush1.bf16.xpose.msra.mxu0 0
      %1046 = vmatprep.subr.bf16.mxu0 0
      %1047 = vmatpush1.bf16.xpose.msra.mxu0 0
      %1048 = vmatprep.subr.bf16.mxu0 0
      %1049 = vmatpush1.bf16.xpose.msra.mxu0 0
      %1050 = vmatprep.subr.bf16.mxu0 0
      %1051 = vmatpush1.bf16.xpose.msra.mxu0 0
      %1052 = vmatprep.subr.bf16.mxu0 0
      %1053 = vmatpush1.bf16.xpose.msra.mxu0 0
      %1054 = vmatprep.subr.bf16.mxu0 0
      %1055 = vmatpush1.bf16.xpose.msra.mxu0 0
      %1056 = vmatprep.subr.bf16.mxu0 0
      %1057 = vmatpush1.bf16.xpose.msra.mxu0 0
      %1058 = vmatprep.subr.bf16.mxu0 0
      %1059 = vmatpush1.bf16.xpose.msra.mxu0 0
      %1060 = vmatprep.subr.bf16.mxu0 0
      %1061 = vmatpush1.bf16.xpose.msra.mxu0 0
      %1062 = vmatprep.mubr.bf16.mxu0 0
      %1063 = vmatmul.mubr.bf16.gmra.mrb[0].mxu0 %v1025
      %v1064 = vpop.f32.mrb[0].mxu0
      %v1065 = vadd.f32 %v680, %v1064
      %v1066 = vpop.f32.mrb[0].mxu0
      %v1067 = vpop.f32.mrb[0].mxu0
      %v1068 = vpop.f32.mrb[0].mxu0
      %1069 = vdwg.mxu0
      %v1070 = vsel %vm681, %v1065, -inf
      %1071 = vmax.xlane.f32.xlu0 %v1070
      %v1072 = vpop.xlane.xlu0 %1071
      %v1073 = vsub.f32 %v1065, %v1072
      %v1074 = vmul.f32 %v1073, 1.442695
      %v1075 = vpow.pop %v1074
      %v1076 = vsel %vm681, %v1075, 0.0
      %1077 = vadd.xlane.f32.xlu0 %v1076
      %v1078 = vpop.xlane.xlu0 %1077
      %v1079 = vrcp.pop %v1078
      %v1080 = vmul.f32 %v1075, %v1079
      %v1081 = vpack.c.bf16 %v1080, %v1080
      %v1083 = vsel %vm681, %v1081, 0
      %v1085 = vsel %vm743, %v1023, 0
      %1087 = vmatprep.subr.bf16.mxu0 0
      %1088 = vmatpush1.bf16.msra.mxu0 %v1085
      %1089 = vmatprep.subr.bf16.mxu0 0
      %1090 = vmatpush1.bf16.msra.mxu0 0
      %1091 = vmatprep.subr.bf16.mxu0 0
      %1092 = vmatpush1.bf16.msra.mxu0 0
      %1093 = vmatprep.subr.bf16.mxu0 0
      %1094 = vmatpush1.bf16.msra.mxu0 0
      %1095 = vmatprep.subr.bf16.mxu0 0
      %1096 = vmatpush1.bf16.msra.mxu0 0
      %1097 = vmatprep.subr.bf16.mxu0 0
      %1098 = vmatpush1.bf16.msra.mxu0 0
      %1099 = vmatprep.subr.bf16.mxu0 0
      %1100 = vmatpush1.bf16.msra.mxu0 0
      %1101 = vmatprep.subr.bf16.mxu0 0
      %1102 = vmatpush1.bf16.msra.mxu0 0
      %1103 = vmatprep.subr.bf16.mxu0 0
      %1104 = vmatpush1.bf16.msra.mxu0 0
      %1105 = vmatprep.subr.bf16.mxu0 0
      %1106 = vmatpush1.bf16.msra.mxu0 0
      %1107 = vmatprep.subr.bf16.mxu0 0
      %1108 = vmatpush1.bf16.msra.mxu0 0
      %1109 = vmatprep.subr.bf16.mxu0 0
      %1110 = vmatpush1.bf16.msra.mxu0 0
      %1111 = vmatprep.subr.bf16.mxu0 0
      %1112 = vmatpush1.bf16.msra.mxu0 0
      %1113 = vmatprep.subr.bf16.mxu0 0
      %1114 = vmatpush1.bf16.msra.mxu0 0
      %1115 = vmatprep.subr.bf16.mxu0 0
      %1116 = vmatpush1.bf16.msra.mxu0 0
      %1117 = vmatprep.subr.bf16.mxu0 0
      %1118 = vmatpush1.bf16.msra.mxu0 0
      %1119 = vmatprep.mubr.bf16.mxu0 0
      %1120 = vmatmul.mubr.bf16.gmra.mrb[0].mxu0 %v1083
      %v1121 = vpop.f32.mrb[0].mxu0
      %v1122 = vadd.f32 0.0, %v1121
      %v1123 = vpop.f32.mrb[0].mxu0
      %v1124 = vpop.f32.mrb[0].mxu0
      %v1125 = vpop.f32.mrb[0].mxu0
      %1126 = vdwg.mxu0
      %1128 = vrot.lane.b32.xlu0 %v1122, 24
      %v1129 = vpop.permute.xlu0 %1128
      %vm1131 = vcmask 261312
      %1132 = vst.msk [vmem:[#allocation3] sm:$0xff] %vm1131, %v1129
      %v1133 = vld [vmem:[%s1] sm:$0xf]
      %v1134 = vlaneseq
      %v1135 = vshrl.u32 %v1134, 7
      %v1136 = vsub.s32 1, %v1135
      %v1137 = vrot.slane %v670, %v1136
      %1138 = vrot.lane.b32.xlu0 %v675, 120
      %v1139 = vpop.permute.xlu0 %1138
      %v1141 = vunpack.c.l.b16 %v1133
      %v1142 = vpack.c.b16 %v1141, %v1141
      %1143 = vrot.lane.b32.xlu0 %v1142, 120
      %v1144 = vpop.permute.xlu0 %1143
      %v1146 = vsel %vm681, %v1139, 0
      %v1149 = vsel %vm681, %v1144, 0
      %1151 = vmatprep.subr.bf16.mxu0 0
      %1152 = vmatpush1.bf16.xpose.msra.mxu0 %v1149
      %1153 = vmatprep.subr.bf16.mxu0 0
      %1154 = vmatpush1.bf16.xpose.msra.mxu0 0
      %1155 = vmatprep.subr.bf16.mxu0 0
      %1156 = vmatpush1.bf16.xpose.msra.mxu0 0
      %1157 = vmatprep.subr.bf16.mxu0 0
      %1158 = vmatpush1.bf16.xpose.msra.mxu0 0
      %1159 = vmatprep.subr.bf16.mxu0 0
      %1160 = vmatpush1.bf16.xpose.msra.mxu0 0
      %1161 = vmatprep.subr.bf16.mxu0 0
      %1162 = vmatpush1.bf16.xpose.msra.mxu0 0
      %1163 = vmatprep.subr.bf16.mxu0 0
      %1164 = vmatpush1.bf16.xpose.msra.mxu0 0
      %1165 = vmatprep.subr.bf16.mxu0 0
      %1166 = vmatpush1.bf16.xpose.msra.mxu0 0
      %1167 = vmatprep.subr.bf16.mxu0 0
      %1168 = vmatpush1.bf16.xpose.msra.mxu0 0
      %1169 = vmatprep.subr.bf16.mxu0 0
      %1170 = vmatpush1.bf16.xpose.msra.mxu0 0
      %1171 = vmatprep.subr.bf16.mxu0 0
      %1172 = vmatpush1.bf16.xpose.msra.mxu0 0
      %1173 = vmatprep.subr.bf16.mxu0 0
      %1174 = vmatpush1.bf16.xpose.msra.mxu0 0
      %1175 = vmatprep.subr.bf16.mxu0 0
      %1176 = vmatpush1.bf16.xpose.msra.mxu0 0
      %1177 = vmatprep.subr.bf16.mxu0 0
      %1178 = vmatpush1.bf16.xpose.msra.mxu0 0
      %1179 = vmatprep.subr.bf16.mxu0 0
      %1180 = vmatpush1.bf16.xpose.msra.mxu0 0
      %1181 = vmatprep.subr.bf16.mxu0 0
      %1182 = vmatpush1.bf16.xpose.msra.mxu0 0
      %1183 = vmatprep.mubr.bf16.mxu0 0
      %1184 = vmatmul.mubr.bf16.gmra.mrb[0].mxu0 %v1146
      %v1185 = vpop.f32.mrb[0].mxu0
      %v1186 = vadd.f32 %v1137, %v1185
      %v1187 = vpop.f32.mrb[0].mxu0
      %v1188 = vpop.f32.mrb[0].mxu0
      %v1189 = vpop.f32.mrb[0].mxu0
      %1190 = vdwg.mxu0
      %v1191 = vsel %vm681, %v1186, -inf
      %1192 = vmax.xlane.f32.xlu0 %v1191
      %v1193 = vpop.xlane.xlu0 %1192
      %v1194 = vsub.f32 %v1186, %v1193
      %v1195 = vmul.f32 %v1194, 1.442695
      %v1196 = vpow.pop %v1195
      %v1197 = vsel %vm681, %v1196, 0.0
      %1198 = vadd.xlane.f32.xlu0 %v1197
      %v1199 = vpop.xlane.xlu0 %1198
      %v1200 = vrcp.pop %v1199
      %v1201 = vmul.f32 %v1196, %v1200
      %v1202 = vpack.c.bf16 %v1201, %v1201
      %v1204 = vsel %vm681, %v1202, 0
      %v1206 = vsel %vm743, %v1144, 0
      %1208 = vmatprep.subr.bf16.mxu0 0
      %1209 = vmatpush1.bf16.msra.mxu0 %v1206
      %1210 = vmatprep.subr.bf16.mxu0 0
      %1211 = vmatpush1.bf16.msra.mxu0 0
      %1212 = vmatprep.subr.bf16.mxu0 0
      %1213 = vmatpush1.bf16.msra.mxu0 0
      %1214 = vmatprep.subr.bf16.mxu0 0
      %1215 = vmatpush1.bf16.msra.mxu0 0
      %1216 = vmatprep.subr.bf16.mxu0 0
      %1217 = vmatpush1.bf16.msra.mxu0 0
      %1218 = vmatprep.subr.bf16.mxu0 0
      %1219 = vmatpush1.bf16.msra.mxu0 0
      %1220 = vmatprep.subr.bf16.mxu0 0
      %1221 = vmatpush1.bf16.msra.mxu0 0
      %1222 = vmatprep.subr.bf16.mxu0 0
      %1223 = vmatpush1.bf16.msra.mxu0 0
      %1224 = vmatprep.subr.bf16.mxu0 0
      %1225 = vmatpush1.bf16.msra.mxu0 0
      %1226 = vmatprep.subr.bf16.mxu0 0
      %1227 = vmatpush1.bf16.msra.mxu0 0
      %1228 = vmatprep.subr.bf16.mxu0 0
      %1229 = vmatpush1.bf16.msra.mxu0 0
      %1230 = vmatprep.subr.bf16.mxu0 0
      %1231 = vmatpush1.bf16.msra.mxu0 0
      %1232 = vmatprep.subr.bf16.mxu0 0
      %1233 = vmatpush1.bf16.msra.mxu0 0
      %1234 = vmatprep.subr.bf16.mxu0 0
      %1235 = vmatpush1.bf16.msra.mxu0 0
      %1236 = vmatprep.subr.bf16.mxu0 0
      %1237 = vmatpush1.bf16.msra.mxu0 0
      %1238 = vmatprep.subr.bf16.mxu0 0
      %1239 = vmatpush1.bf16.msra.mxu0 0
      %1240 = vmatprep.mubr.bf16.mxu0 0
      %1241 = vmatmul.mubr.bf16.gmra.mrb[0].mxu0 %v1204
      %v1242 = vpop.f32.mrb[0].mxu0
      %v1243 = vadd.f32 0.0, %v1242
      %v1244 = vpop.f32.mrb[0].mxu0
      %v1245 = vpop.f32.mrb[0].mxu0
      %v1246 = vpop.f32.mrb[0].mxu0
      %1247 = vdwg.mxu0
      %1248 = vst.msk [vmem:[#allocation3 + $0x8] sm:$0xff] %vm681, %v1243
      %v1249 = vld [vmem:[%s1] sm:$0xf]
      %1250 = vrot.lane.b32.xlu0 %v675, 104
      %v1251 = vpop.permute.xlu0 %1250
      %v1253 = vunpack.c.l.b16 %v1249
      %v1254 = vpack.c.b16 %v1253, %v1253
      %1255 = vrot.lane.b32.xlu0 %v1254, 104
      %v1256 = vpop.permute.xlu0 %1255
      %v1258 = vsel %vm681, %v1251, 0
      %v1261 = vsel %vm681, %v1256, 0
      %1263 = vmatprep.subr.bf16.mxu0 0
      %1264 = vmatpush1.bf16.xpose.msra.mxu0 %v1261
      %1265 = vmatprep.subr.bf16.mxu0 0
      %1266 = vmatpush1.bf16.xpose.msra.mxu0 0
      %1267 = vmatprep.subr.bf16.mxu0 0
      %1268 = vmatpush1.bf16.xpose.msra.mxu0 0
      %1269 = vmatprep.subr.bf16.mxu0 0
      %1270 = vmatpush1.bf16.xpose.msra.mxu0 0
      %1271 = vmatprep.subr.bf16.mxu0 0
      %1272 = vmatpush1.bf16.xpose.msra.mxu0 0
      %1273 = vmatprep.subr.bf16.mxu0 0
      %1274 = vmatpush1.bf16.xpose.msra.mxu0 0
      %1275 = vmatprep.subr.bf16.mxu0 0
      %1276 = vmatpush1.bf16.xpose.msra.mxu0 0
      %1277 = vmatprep.subr.bf16.mxu0 0
      %1278 = vmatpush1.bf16.xpose.msra.mxu0 0
      %1279 = vmatprep.subr.bf16.mxu0 0
      %1280 = vmatpush1.bf16.xpose.msra.mxu0 0
      %1281 = vmatprep.subr.bf16.mxu0 0
      %1282 = vmatpush1.bf16.xpose.msra.mxu0 0
      %1283 = vmatprep.subr.bf16.mxu0 0
      %1284 = vmatpush1.bf16.xpose.msra.mxu0 0
      %1285 = vmatprep.subr.bf16.mxu0 0
      %1286 = vmatpush1.bf16.xpose.msra.mxu0 0
      %1287 = vmatprep.subr.bf16.mxu0 0
      %1288 = vmatpush1.bf16.xpose.msra.mxu0 0
      %1289 = vmatprep.subr.bf16.mxu0 0
      %1290 = vmatpush1.bf16.xpose.msra.mxu0 0
      %1291 = vmatprep.subr.bf16.mxu0 0
      %1292 = vmatpush1.bf16.xpose.msra.mxu0 0
      %1293 = vmatprep.subr.bf16.mxu0 0
      %1294 = vmatpush1.bf16.xpose.msra.mxu0 0
      %1295 = vmatprep.mubr.bf16.mxu0 0
      %1296 = vmatmul.mubr.bf16.gmra.mrb[0].mxu0 %v1258
      %v1297 = vpop.f32.mrb[0].mxu0
      %v1298 = vadd.f32 %v1137, %v1297
      %v1299 = vpop.f32.mrb[0].mxu0
      %v1300 = vpop.f32.mrb[0].mxu0
      %v1301 = vpop.f32.mrb[0].mxu0
      %1302 = vdwg.mxu0
      %v1303 = vsel %vm681, %v1298, -inf
      %1304 = vmax.xlane.f32.xlu0 %v1303
      %v1305 = vpop.xlane.xlu0 %1304
      %v1306 = vsub.f32 %v1298, %v1305
      %v1307 = vmul.f32 %v1306, 1.442695
      %v1308 = vpow.pop %v1307
      %v1309 = vsel %vm681, %v1308, 0.0
      %1310 = vadd.xlane.f32.xlu0 %v1309
      %v1311 = vpop.xlane.xlu0 %1310
      %v1312 = vrcp.pop %v1311
      %v1313 = vmul.f32 %v1308, %v1312
      %v1314 = vpack.c.bf16 %v1313, %v1313
      %v1316 = vsel %vm681, %v1314, 0
      %v1318 = vsel %vm743, %v1256, 0
      %1320 = vmatprep.subr.bf16.mxu0 0
      %1321 = vmatpush1.bf16.msra.mxu0 %v1318
      %1322 = vmatprep.subr.bf16.mxu0 0
      %1323 = vmatpush1.bf16.msra.mxu0 0
      %1324 = vmatprep.subr.bf16.mxu0 0
      %1325 = vmatpush1.bf16.msra.mxu0 0
      %1326 = vmatprep.subr.bf16.mxu0 0
      %1327 = vmatpush1.bf16.msra.mxu0 0
      %1328 = vmatprep.subr.bf16.mxu0 0
      %1329 = vmatpush1.bf16.msra.mxu0 0
      %1330 = vmatprep.subr.bf16.mxu0 0
      %1331 = vmatpush1.bf16.msra.mxu0 0
      %1332 = vmatprep.subr.bf16.mxu0 0
      %1333 = vmatpush1.bf16.msra.mxu0 0
      %1334 = vmatprep.subr.bf16.mxu0 0
      %1335 = vmatpush1.bf16.msra.mxu0 0
      %1336 = vmatprep.subr.bf16.mxu0 0
      %1337 = vmatpush1.bf16.msra.mxu0 0
      %1338 = vmatprep.subr.bf16.mxu0 0
      %1339 = vmatpush1.bf16.msra.mxu0 0
      %1340 = vmatprep.subr.bf16.mxu0 0
      %1341 = vmatpush1.bf16.msra.mxu0 0
      %1342 = vmatprep.subr.bf16.mxu0 0
      %1343 = vmatpush1.bf16.msra.mxu0 0
      %1344 = vmatprep.subr.bf16.mxu0 0
      %1345 = vmatpush1.bf16.msra.mxu0 0
      %1346 = vmatprep.subr.bf16.mxu0 0
      %1347 = vmatpush1.bf16.msra.mxu0 0
      %1348 = vmatprep.subr.bf16.mxu0 0
      %1349 = vmatpush1.bf16.msra.mxu0 0
      %1350 = vmatprep.subr.bf16.mxu0 0
      %1351 = vmatpush1.bf16.msra.mxu0 0
      %1352 = vmatprep.mubr.bf16.mxu0 0
      %1353 = vmatmul.mubr.bf16.gmra.mrb[0].mxu0 %v1316
      %v1354 = vpop.f32.mrb[0].mxu0
      %v1355 = vadd.f32 0.0, %v1354
      %v1356 = vpop.f32.mrb[0].mxu0
      %v1357 = vpop.f32.mrb[0].mxu0
      %v1358 = vpop.f32.mrb[0].mxu0
      %1359 = vdwg.mxu0
      %1361 = vrot.lane.b32.xlu0 %v1355, 8
      %v1362 = vpop.permute.xlu0 %1361
      %1364 = vst.msk [vmem:[#allocation3 + $0x8] sm:$0xff] %vm903, %v1362
      %v1365 = vld [vmem:[%s1 + $0x4] sm:$0xf]
      %1366 = vrot.lane.b32.xlu0 %v906, 120
      %v1367 = vpop.permute.xlu0 %1366
      %v1369 = vunpack.c.l.b16 %v1365
      %v1370 = vpack.c.b16 %v1369, %v1369
      %1371 = vrot.lane.b32.xlu0 %v1370, 120
      %v1372 = vpop.permute.xlu0 %1371
      %v1374 = vsel %vm681, %v1367, 0
      %v1377 = vsel %vm681, %v1372, 0
      %1379 = vmatprep.subr.bf16.mxu0 0
      %1380 = vmatpush1.bf16.xpose.msra.mxu0 %v1377
      %1381 = vmatprep.subr.bf16.mxu0 0
      %1382 = vmatpush1.bf16.xpose.msra.mxu0 0
      %1383 = vmatprep.subr.bf16.mxu0 0
      %1384 = vmatpush1.bf16.xpose.msra.mxu0 0
      %1385 = vmatprep.subr.bf16.mxu0 0
      %1386 = vmatpush1.bf16.xpose.msra.mxu0 0
      %1387 = vmatprep.subr.bf16.mxu0 0
      %1388 = vmatpush1.bf16.xpose.msra.mxu0 0
      %1389 = vmatprep.subr.bf16.mxu0 0
      %1390 = vmatpush1.bf16.xpose.msra.mxu0 0
      %1391 = vmatprep.subr.bf16.mxu0 0
      %1392 = vmatpush1.bf16.xpose.msra.mxu0 0
      %1393 = vmatprep.subr.bf16.mxu0 0
      %1394 = vmatpush1.bf16.xpose.msra.mxu0 0
      %1395 = vmatprep.subr.bf16.mxu0 0
      %1396 = vmatpush1.bf16.xpose.msra.mxu0 0
      %1397 = vmatprep.subr.bf16.mxu0 0
      %1398 = vmatpush1.bf16.xpose.msra.mxu0 0
      %1399 = vmatprep.subr.bf16.mxu0 0
      %1400 = vmatpush1.bf16.xpose.msra.mxu0 0
      %1401 = vmatprep.subr.bf16.mxu0 0
      %1402 = vmatpush1.bf16.xpose.msra.mxu0 0
      %1403 = vmatprep.subr.bf16.mxu0 0
      %1404 = vmatpush1.bf16.xpose.msra.mxu0 0
      %1405 = vmatprep.subr.bf16.mxu0 0
      %1406 = vmatpush1.bf16.xpose.msra.mxu0 0
      %1407 = vmatprep.subr.bf16.mxu0 0
      %1408 = vmatpush1.bf16.xpose.msra.mxu0 0
      %1409 = vmatprep.subr.bf16.mxu0 0
      %1410 = vmatpush1.bf16.xpose.msra.mxu0 0
      %1411 = vmatprep.mubr.bf16.mxu0 0
      %1412 = vmatmul.mubr.bf16.gmra.mrb[0].mxu0 %v1374
      %v1413 = vpop.f32.mrb[0].mxu0
      %v1414 = vadd.f32 %v1137, %v1413
      %v1415 = vpop.f32.mrb[0].mxu0
      %v1416 = vpop.f32.mrb[0].mxu0
      %v1417 = vpop.f32.mrb[0].mxu0
      %1418 = vdwg.mxu0
      %v1419 = vsel %vm681, %v1414, -inf
      %1420 = vmax.xlane.f32.xlu0 %v1419
      %v1421 = vpop.xlane.xlu0 %1420
      %v1422 = vsub.f32 %v1414, %v1421
      %v1423 = vmul.f32 %v1422, 1.442695
      %v1424 = vpow.pop %v1423
      %v1425 = vsel %vm681, %v1424, 0.0
      %1426 = vadd.xlane.f32.xlu0 %v1425
      %v1427 = vpop.xlane.xlu0 %1426
      %v1428 = vrcp.pop %v1427
      %v1429 = vmul.f32 %v1424, %v1428
      %v1430 = vpack.c.bf16 %v1429, %v1429
      %v1432 = vsel %vm681, %v1430, 0
      %v1434 = vsel %vm743, %v1372, 0
      %1436 = vmatprep.subr.bf16.mxu0 0
      %1437 = vmatpush1.bf16.msra.mxu0 %v1434
      %1438 = vmatprep.subr.bf16.mxu0 0
      %1439 = vmatpush1.bf16.msra.mxu0 0
      %1440 = vmatprep.subr.bf16.mxu0 0
      %1441 = vmatpush1.bf16.msra.mxu0 0
      %1442 = vmatprep.subr.bf16.mxu0 0
      %1443 = vmatpush1.bf16.msra.mxu0 0
      %1444 = vmatprep.subr.bf16.mxu0 0
      %1445 = vmatpush1.bf16.msra.mxu0 0
      %1446 = vmatprep.subr.bf16.mxu0 0
      %1447 = vmatpush1.bf16.msra.mxu0 0
      %1448 = vmatprep.subr.bf16.mxu0 0
      %1449 = vmatpush1.bf16.msra.mxu0 0
      %1450 = vmatprep.subr.bf16.mxu0 0
      %1451 = vmatpush1.bf16.msra.mxu0 0
      %1452 = vmatprep.subr.bf16.mxu0 0
      %1453 = vmatpush1.bf16.msra.mxu0 0
      %1454 = vmatprep.subr.bf16.mxu0 0
      %1455 = vmatpush1.bf16.msra.mxu0 0
      %1456 = vmatprep.subr.bf16.mxu0 0
      %1457 = vmatpush1.bf16.msra.mxu0 0
      %1458 = vmatprep.subr.bf16.mxu0 0
      %1459 = vmatpush1.bf16.msra.mxu0 0
      %1460 = vmatprep.subr.bf16.mxu0 0
      %1461 = vmatpush1.bf16.msra.mxu0 0
      %1462 = vmatprep.subr.bf16.mxu0 0
      %1463 = vmatpush1.bf16.msra.mxu0 0
      %1464 = vmatprep.subr.bf16.mxu0 0
      %1465 = vmatpush1.bf16.msra.mxu0 0
      %1466 = vmatprep.subr.bf16.mxu0 0
      %1467 = vmatpush1.bf16.msra.mxu0 0
      %1468 = vmatprep.mubr.bf16.mxu0 0
      %1469 = vmatmul.mubr.bf16.gmra.mrb[0].mxu0 %v1432
      %v1470 = vpop.f32.mrb[0].mxu0
      %v1471 = vadd.f32 0.0, %v1470
      %v1472 = vpop.f32.mrb[0].mxu0
      %v1473 = vpop.f32.mrb[0].mxu0
      %v1474 = vpop.f32.mrb[0].mxu0
      %1475 = vdwg.mxu0
      %1477 = vrot.lane.b32.xlu0 %v1471, 16
      %v1478 = vpop.permute.xlu0 %1477
      %1480 = vst.msk [vmem:[#allocation3 + $0x8] sm:$0xff] %vm1014, %v1478
      %v1481 = vld [vmem:[%s1 + $0x4] sm:$0xf]
      %1482 = vrot.lane.b32.xlu0 %v906, 104
      %v1483 = vpop.permute.xlu0 %1482
      %v1485 = vunpack.c.l.b16 %v1481
      %v1486 = vpack.c.b16 %v1485, %v1485
      %1487 = vrot.lane.b32.xlu0 %v1486, 104
      %v1488 = vpop.permute.xlu0 %1487
      %v1490 = vsel %vm681, %v1483, 0
      %v1493 = vsel %vm681, %v1488, 0
      %1495 = vmatprep.subr.bf16.mxu0 0
      %1496 = vmatpush1.bf16.xpose.msra.mxu0 %v1493
      %1497 = vmatprep.subr.bf16.mxu0 0
      %1498 = vmatpush1.bf16.xpose.msra.mxu0 0
      %1499 = vmatprep.subr.bf16.mxu0 0
      %1500 = vmatpush1.bf16.xpose.msra.mxu0 0
      %1501 = vmatprep.subr.bf16.mxu0 0
      %1502 = vmatpush1.bf16.xpose.msra.mxu0 0
      %1503 = vmatprep.subr.bf16.mxu0 0
      %1504 = vmatpush1.bf16.xpose.msra.mxu0 0
      %1505 = vmatprep.subr.bf16.mxu0 0
      %1506 = vmatpush1.bf16.xpose.msra.mxu0 0
      %1507 = vmatprep.subr.bf16.mxu0 0
      %1508 = vmatpush1.bf16.xpose.msra.mxu0 0
      %1509 = vmatprep.subr.bf16.mxu0 0
      %1510 = vmatpush1.bf16.xpose.msra.mxu0 0
      %1511 = vmatprep.subr.bf16.mxu0 0
      %1512 = vmatpush1.bf16.xpose.msra.mxu0 0
      %1513 = vmatprep.subr.bf16.mxu0 0
      %1514 = vmatpush1.bf16.xpose.msra.mxu0 0
      %1515 = vmatprep.subr.bf16.mxu0 0
      %1516 = vmatpush1.bf16.xpose.msra.mxu0 0
      %1517 = vmatprep.subr.bf16.mxu0 0
      %1518 = vmatpush1.bf16.xpose.msra.mxu0 0
      %1519 = vmatprep.subr.bf16.mxu0 0
      %1520 = vmatpush1.bf16.xpose.msra.mxu0 0
      %1521 = vmatprep.subr.bf16.mxu0 0
      %1522 = vmatpush1.bf16.xpose.msra.mxu0 0
      %1523 = vmatprep.subr.bf16.mxu0 0
      %1524 = vmatpush1.bf16.xpose.msra.mxu0 0
      %1525 = vmatprep.subr.bf16.mxu0 0
      %1526 = vmatpush1.bf16.xpose.msra.mxu0 0
      %1527 = vmatprep.mubr.bf16.mxu0 0
      %1528 = vmatmul.mubr.bf16.gmra.mrb[0].mxu0 %v1490
      %v1529 = vpop.f32.mrb[0].mxu0
      %v1530 = vadd.f32 %v1137, %v1529
      %v1531 = vpop.f32.mrb[0].mxu0
      %v1532 = vpop.f32.mrb[0].mxu0
      %v1533 = vpop.f32.mrb[0].mxu0
      %1534 = vdwg.mxu0
      %v1535 = vsel %vm681, %v1530, -inf
      %1536 = vmax.xlane.f32.xlu0 %v1535
      %v1537 = vpop.xlane.xlu0 %1536
      %v1538 = vsub.f32 %v1530, %v1537
      %v1539 = vmul.f32 %v1538, 1.442695
      %v1540 = vpow.pop %v1539
      %v1541 = vsel %vm681, %v1540, 0.0
      %1542 = vadd.xlane.f32.xlu0 %v1541
      %v1543 = vpop.xlane.xlu0 %1542
      %v1544 = vrcp.pop %v1543
      %v1545 = vmul.f32 %v1540, %v1544
      %v1546 = vpack.c.bf16 %v1545, %v1545
      %v1548 = vsel %vm681, %v1546, 0
      %v1550 = vsel %vm743, %v1488, 0
      %1552 = vmatprep.subr.bf16.mxu0 0
      %1553 = vmatpush1.bf16.msra.mxu0 %v1550
      %1554 = vmatprep.subr.bf16.mxu0 0
      %1555 = vmatpush1.bf16.msra.mxu0 0
      %1556 = vmatprep.subr.bf16.mxu0 0
      %1557 = vmatpush1.bf16.msra.mxu0 0
      %1558 = vmatprep.subr.bf16.mxu0 0
      %1559 = vmatpush1.bf16.msra.mxu0 0
      %1560 = vmatprep.subr.bf16.mxu0 0
      %1561 = vmatpush1.bf16.msra.mxu0 0
      %1562 = vmatprep.subr.bf16.mxu0 0
      %1563 = vmatpush1.bf16.msra.mxu0 0
      %1564 = vmatprep.subr.bf16.mxu0 0
      %1565 = vmatpush1.bf16.msra.mxu0 0
      %1566 = vmatprep.subr.bf16.mxu0 0
      %1567 = vmatpush1.bf16.msra.mxu0 0
      %1568 = vmatprep.subr.bf16.mxu0 0
      %1569 = vmatpush1.bf16.msra.mxu0 0
      %1570 = vmatprep.subr.bf16.mxu0 0
      %1571 = vmatpush1.bf16.msra.mxu0 0
      %1572 = vmatprep.subr.bf16.mxu0 0
      %1573 = vmatpush1.bf16.msra.mxu0 0
      %1574 = vmatprep.subr.bf16.mxu0 0
      %1575 = vmatpush1.bf16.msra.mxu0 0
      %1576 = vmatprep.subr.bf16.mxu0 0
      %1577 = vmatpush1.bf16.msra.mxu0 0
      %1578 = vmatprep.subr.bf16.mxu0 0
      %1579 = vmatpush1.bf16.msra.mxu0 0
      %1580 = vmatprep.subr.bf16.mxu0 0
      %1581 = vmatpush1.bf16.msra.mxu0 0
      %1582 = vmatprep.subr.bf16.mxu0 0
      %1583 = vmatpush1.bf16.msra.mxu0 0
      %1584 = vmatprep.mubr.bf16.mxu0 0
      %1585 = vmatmul.mubr.bf16.gmra.mrb[0].mxu0 %v1548
      %v1586 = vpop.f32.mrb[0].mxu0
      %v1587 = vadd.f32 0.0, %v1586
      %v1588 = vpop.f32.mrb[0].mxu0
      %v1589 = vpop.f32.mrb[0].mxu0
      %v1590 = vpop.f32.mrb[0].mxu0
      %1591 = vdwg.mxu0
      %1593 = vrot.lane.b32.xlu0 %v1587, 24
      %v1594 = vpop.permute.xlu0 %1593
      %1596 = vst.msk [vmem:[#allocation3 + $0x8] sm:$0xff] %vm1131, %v1594
      %v1597 = vld [vmem:[#allocation3] sm:$0xff]
      %v1598 = vld [vmem:[#allocation3 + $0x8] sm:$0xff]
      %v1599 = vpack.c.bf16 %v1598, %v1597
      %v1600 = vld [vmem:[%s621] sm:$0xf]
      %v1601 = vld [vmem:[%s621 + $0x4] sm:$0xf]
      %v1602 = vld [vmem:[%s621 + $0x8] sm:$0xf]
      %v1603 = vld [vmem:[%s621 + $0xc] sm:$0xf]
      %v1604 = vld [vmem:[%s624] sm:$0x1]
      %v1606 = vlaneseq
      %v1607 = vshrl.u32 %v1606, 7
      %v1608 = vsub.s32 0, %v1607
      %v1609 = vrot.slane %v1604, %v1608
      %v1615 = vunpack.c.l.b16 %v1600
      %v1616 = vunpack.c.l.b16 %v1601
      %v1617 = vunpack.c.l.b16 %v1602
      %v1618 = vunpack.c.l.b16 %v1603
      %v1619 = vpack.c.b16 %v1616, %v1615
      %v1620 = vpack.c.b16 %v1618, %v1617
      %vm1623 = vcmask 261120
      %v1625 = vsel %vm1623, %v1599, 0
      %1627 = vmatprep.subr.bf16.mxu0 0
      %1628 = vmatpush1.bf16.msra.mxu0 %v1619
      %1629 = vmatprep.subr.bf16.mxu0 0
      %1630 = vmatpush1.bf16.msra.mxu0 %v1620
      %1631 = vmatprep.subr.bf16.mxu0 0
      %1632 = vmatpush1.bf16.msra.mxu0 0
      %1633 = vmatprep.subr.bf16.mxu0 0
      %1634 = vmatpush1.bf16.msra.mxu0 0
      %1635 = vmatprep.subr.bf16.mxu0 0
      %1636 = vmatpush1.bf16.msra.mxu0 0
      %1637 = vmatprep.subr.bf16.mxu0 0
      %1638 = vmatpush1.bf16.msra.mxu0 0
      %1639 = vmatprep.subr.bf16.mxu0 0
      %1640 = vmatpush1.bf16.msra.mxu0 0
      %1641 = vmatprep.subr.bf16.mxu0 0
      %1642 = vmatpush1.bf16.msra.mxu0 0
      %1643 = vmatprep.subr.bf16.mxu0 0
      %1644 = vmatpush1.bf16.msra.mxu0 0
      %1645 = vmatprep.subr.bf16.mxu0 0
      %1646 = vmatpush1.bf16.msra.mxu0 0
      %1647 = vmatprep.subr.bf16.mxu0 0
      %1648 = vmatpush1.bf16.msra.mxu0 0
      %1649 = vmatprep.subr.bf16.mxu0 0
      %1650 = vmatpush1.bf16.msra.mxu0 0
      %1651 = vmatprep.subr.bf16.mxu0 0
      %1652 = vmatpush1.bf16.msra.mxu0 0
      %1653 = vmatprep.subr.bf16.mxu0 0
      %1654 = vmatpush1.bf16.msra.mxu0 0
      %1655 = vmatprep.subr.bf16.mxu0 0
      %1656 = vmatpush1.bf16.msra.mxu0 0
      %1657 = vmatprep.subr.bf16.mxu0 0
      %1658 = vmatpush1.bf16.msra.mxu0 0
      %1659 = vmatprep.mubr.bf16.mxu0 0
      %1660 = vmatmul.mubr.bf16.gmra.mrb[0].mxu0 %v1625
      %v1661 = vpop.f32.mrb[0].mxu0
      %v1662 = vadd.f32 %v1609, %v1661
      %v1663 = vpop.f32.mrb[0].mxu0
      %v1664 = vpop.f32.mrb[0].mxu0
      %v1665 = vadd.f32 %v1609, %v1664
      %v1666 = vpop.f32.mrb[0].mxu0
      %1667 = vdwg.mxu0
      %v1668 = vadd.f32 %v1662, %v668
      %v1669 = vadd.f32 %v1665, %v669
      %v1670 = vld [vmem:[%s627] sm:$0x1]
      %v1671 = vld [vmem:[%s630] sm:$0x1]
      %v1672 = vsel %vm1623, %v1668, 0.0
      %1673 = vadd.xlane.f32.xlu0 %v1672
      %v1674 = vpop.xlane.xlu0 %1673
      %v1675 = vsel %vm1623, %v1669, 0.0
      %1676 = vadd.xlane.f32.xlu0 %v1675
      %v1677 = vpop.xlane.xlu0 %1676
      %v1678 = vrcp.pop 32.0
      %v1679 = vmul.f32 %v1674, %v1678
      %v1680 = vmul.f32 %v1677, %v1678
      %v1681 = vsub.f32 %v1668, %v1679
      %v1682 = vsub.f32 %v1669, %v1680
      %v1683 = vmul.f32 %v1681, %v1681
      %v1684 = vmul.f32 %v1682, %v1682
      %v1685 = vsel %vm1623, %v1683, 0.0
      %1686 = vadd.xlane.f32.xlu0 %v1685
      %v1687 = vpop.xlane.xlu0 %1686
      %v1688 = vsel %vm1623, %v1684, 0.0
      %1689 = vadd.xlane.f32.xlu0 %v1688
      %v1690 = vpop.xlane.xlu0 %1689
      %v1691 = vmul.f32 %v1687, %v1678
      %v1692 = vmul.f32 %v1690, %v1678
      %v1693 = vadd.f32 %v1691, 1e-05
      %v1694 = vadd.f32 %v1692, 1e-05
      %v1695 = vrsqrt.pop %v1693
      %v1696 = vrsqrt.pop %v1694
      %v1697 = vmul.f32 %v1681, %v1695
      %v1698 = vmul.f32 %v1682, %v1696
      %v1700 = vlaneseq
      %v1701 = vshrl.u32 %v1700, 7
      %v1702 = vsub.s32 0, %v1701
      %v1703 = vrot.slane %v1670, %v1702
      %v1705 = vmul.f32 %v1697, %v1703
      %v1706 = vmul.f32 %v1698, %v1703
      %v1708 = vlaneseq
      %v1709 = vshrl.u32 %v1708, 7
      %v1710 = vsub.s32 0, %v1709
      %v1711 = vrot.slane %v1671, %v1710
      %v1713 = vadd.f32 %v1705, %v1711
      %v1714 = vadd.f32 %v1706, %v1711
      %1716 = vset.pattern.permute.xlu0 0
      %1717 = vperm.xlu0 %1716, %v671
      %v1718 = vpop.permute.xlu0 %1717
      %1721 = vset.pattern.permute.xlu0 0
      %1722 = vperm.xlu0 %1721, %v672
      %v1723 = vpop.permute.xlu0 %1722
      %v1725 = vmul.f32 %v1713, %v1718
      %v1726 = vmul.f32 %v1714, %v1723
      %v1727 = vpack.c.bf16 %v1726, %v1725
      %v1728 = vld [vmem:[%s635] sm:$0xf]
      %v1729 = vld [vmem:[%s635 + $0x4] sm:$0xf]
      %v1730 = vld [vmem:[%s635 + $0x8] sm:$0xf]
      %v1731 = vld [vmem:[%s635 + $0xc] sm:$0xf]
      %v1732 = vld [vmem:[%s638] sm:$0x1]
      %v1734 = vlaneseq
      %v1735 = vshrl.u32 %v1734, 7
      %v1736 = vsub.s32 0, %v1735
      %v1737 = vrot.slane %v1732, %v1736
      %v1743 = vunpack.c.l.b16 %v1728
      %v1744 = vunpack.c.l.b16 %v1729
      %v1745 = vunpack.c.l.b16 %v1730
      %v1746 = vunpack.c.l.b16 %v1731
      %v1747 = vpack.c.b16 %v1744, %v1743
      %v1748 = vpack.c.b16 %v1746, %v1745
      %v1752 = vsel %vm1623, %v1727, 0
      %1754 = vmatprep.subr.bf16.mxu0 0
      %1755 = vmatpush1.bf16.msra.mxu0 %v1747
      %1756 = vmatprep.subr.bf16.mxu0 0
      %1757 = vmatpush1.bf16.msra.mxu0 %v1748
      %1758 = vmatprep.subr.bf16.mxu0 0
      %1759 = vmatpush1.bf16.msra.mxu0 0
      %1760 = vmatprep.subr.bf16.mxu0 0
      %1761 = vmatpush1.bf16.msra.mxu0 0
      %1762 = vmatprep.subr.bf16.mxu0 0
      %1763 = vmatpush1.bf16.msra.mxu0 0
      %1764 = vmatprep.subr.bf16.mxu0 0
      %1765 = vmatpush1.bf16.msra.mxu0 0
      %1766 = vmatprep.subr.bf16.mxu0 0
      %1767 = vmatpush1.bf16.msra.mxu0 0
      %1768 = vmatprep.subr.bf16.mxu0 0
      %1769 = vmatpush1.bf16.msra.mxu0 0
      %1770 = vmatprep.subr.bf16.mxu0 0
      %1771 = vmatpush1.bf16.msra.mxu0 0
      %1772 = vmatprep.subr.bf16.mxu0 0
      %1773 = vmatpush1.bf16.msra.mxu0 0
      %1774 = vmatprep.subr.bf16.mxu0 0
      %1775 = vmatpush1.bf16.msra.mxu0 0
      %1776 = vmatprep.subr.bf16.mxu0 0
      %1777 = vmatpush1.bf16.msra.mxu0 0
      %1778 = vmatprep.subr.bf16.mxu0 0
      %1779 = vmatpush1.bf16.msra.mxu0 0
      %1780 = vmatprep.subr.bf16.mxu0 0
      %1781 = vmatpush1.bf16.msra.mxu0 0
      %1782 = vmatprep.subr.bf16.mxu0 0
      %1783 = vmatpush1.bf16.msra.mxu0 0
      %1784 = vmatprep.subr.bf16.mxu0 0
      %1785 = vmatpush1.bf16.msra.mxu0 0
      %1786 = vmatprep.mubr.bf16.mxu0 0
      %1787 = vmatmul.mubr.bf16.gmra.mrb[0].mxu0 %v1752
      %v1788 = vpop.f32.mrb[0].mxu0
      %v1789 = vadd.f32 %v1737, %v1788
      %v1790 = vpop.f32.mrb[0].mxu0
      %v1791 = vpop.f32.mrb[0].mxu0
      %v1792 = vadd.f32 %v1737, %v1791
      %v1793 = vpop.f32.mrb[0].mxu0
      %1794 = vdwg.mxu0
      %v1795 = vmax.f32 %v1789, 0.0
      %v1796 = vmax.f32 %v1792, 0.0
      %v1797 = vpack.c.bf16 %v1796, %v1795
      %v1798 = vld [vmem:[%s643] sm:$0xf]
      %v1799 = vld [vmem:[%s643 + $0x4] sm:$0xf]
      %v1800 = vld [vmem:[%s643 + $0x8] sm:$0xf]
      %v1801 = vld [vmem:[%s643 + $0xc] sm:$0xf]
      %v1802 = vld [vmem:[%s643 + $0x10] sm:$0xf]
      %v1803 = vld [vmem:[%s643 + $0x14] sm:$0xf]
      %v1804 = vld [vmem:[%s643 + $0x18] sm:$0xf]
      %v1805 = vld [vmem:[%s643 + $0x1c] sm:$0xf]
      %v1806 = vld [vmem:[%s646] sm:$0x1]
      %v1808 = vlaneseq
      %v1809 = vshrl.u32 %v1808, 7
      %v1810 = vsub.s32 0, %v1809
      %v1811 = vrot.slane %v1806, %v1810
      %v1821 = vunpack.c.l.b16 %v1798
      %v1822 = vunpack.c.l.b16 %v1799
      %v1823 = vunpack.c.l.b16 %v1800
      %v1824 = vunpack.c.l.b16 %v1801
      %v1825 = vunpack.c.l.b16 %v1802
      %v1826 = vunpack.c.l.b16 %v1803
      %v1827 = vunpack.c.l.b16 %v1804
      %v1828 = vunpack.c.l.b16 %v1805
      %v1829 = vpack.c.b16 %v1822, %v1821
      %v1830 = vpack.c.b16 %v1824, %v1823
      %v1831 = vpack.c.b16 %v1826, %v1825
      %v1832 = vpack.c.b16 %v1828, %v1827
      %vm1837 = vcmask 523264
      %v1839 = vsel %vm1837, %v1797, 0
      %1841 = vmatprep.subr.bf16.mxu0 0
      %1842 = vmatpush1.bf16.msra.mxu0 %v1829
      %1843 = vmatprep.subr.bf16.mxu0 0
      %1844 = vmatpush1.bf16.msra.mxu0 %v1830
      %1845 = vmatprep.subr.bf16.mxu0 0
      %1846 = vmatpush1.bf16.msra.mxu0 %v1831
      %1847 = vmatprep.subr.bf16.mxu0 0
      %1848 = vmatpush1.bf16.msra.mxu0 %v1832
      %1849 = vmatprep.subr.bf16.mxu0 0
      %1850 = vmatpush1.bf16.msra.mxu0 0
      %1851 = vmatprep.subr.bf16.mxu0 0
      %1852 = vmatpush1.bf16.msra.mxu0 0
      %1853 = vmatprep.subr.bf16.mxu0 0
      %1854 = vmatpush1.bf16.msra.mxu0 0
      %1855 = vmatprep.subr.bf16.mxu0 0
      %1856 = vmatpush1.bf16.msra.mxu0 0
      %1857 = vmatprep.subr.bf16.mxu0 0
      %1858 = vmatpush1.bf16.msra.mxu0 0
      %1859 = vmatprep.subr.bf16.mxu0 0
      %1860 = vmatpush1.bf16.msra.mxu0 0
      %1861 = vmatprep.subr.bf16.mxu0 0
      %1862 = vmatpush1.bf16.msra.mxu0 0
      %1863 = vmatprep.subr.bf16.mxu0 0
      %1864 = vmatpush1.bf16.msra.mxu0 0
      %1865 = vmatprep.subr.bf16.mxu0 0
      %1866 = vmatpush1.bf16.msra.mxu0 0
      %1867 = vmatprep.subr.bf16.mxu0 0
      %1868 = vmatpush1.bf16.msra.mxu0 0
      %1869 = vmatprep.subr.bf16.mxu0 0
      %1870 = vmatpush1.bf16.msra.mxu0 0
      %1871 = vmatprep.subr.bf16.mxu0 0
      %1872 = vmatpush1.bf16.msra.mxu0 0
      %1873 = vmatprep.mubr.bf16.mxu0 0
      %1874 = vmatmul.mubr.bf16.gmra.mrb[0].mxu0 %v1839
      %v1875 = vpop.f32.mrb[0].mxu0
      %v1876 = vadd.f32 %v1811, %v1875
      %v1877 = vpop.f32.mrb[0].mxu0
      %v1878 = vpop.f32.mrb[0].mxu0
      %v1879 = vadd.f32 %v1811, %v1878
      %v1880 = vpop.f32.mrb[0].mxu0
      %1881 = vdwg.mxu0
      %v1882 = vadd.f32 %v1876, %v1725
      %v1883 = vadd.f32 %v1879, %v1726
      %v1884 = vld [vmem:[%s649] sm:$0x1]
      %v1885 = vld [vmem:[%s652] sm:$0x1]
      %v1886 = vsel %vm1623, %v1882, 0.0
      %1887 = vadd.xlane.f32.xlu0 %v1886
      %v1888 = vpop.xlane.xlu0 %1887
      %v1889 = vsel %vm1623, %v1883, 0.0
      %1890 = vadd.xlane.f32.xlu0 %v1889
      %v1891 = vpop.xlane.xlu0 %1890
      %v1892 = vmul.f32 %v1888, %v1678
      %v1893 = vmul.f32 %v1891, %v1678
      %v1894 = vsub.f32 %v1882, %v1892
      %v1895 = vsub.f32 %v1883, %v1893
      %v1896 = vmul.f32 %v1894, %v1894
      %v1897 = vmul.f32 %v1895, %v1895
      %v1898 = vsel %vm1623, %v1896, 0.0
      %1899 = vadd.xlane.f32.xlu0 %v1898
      %v1900 = vpop.xlane.xlu0 %1899
      %v1901 = vsel %vm1623, %v1897, 0.0
      %1902 = vadd.xlane.f32.xlu0 %v1901
      %v1903 = vpop.xlane.xlu0 %1902
      %v1904 = vmul.f32 %v1900, %v1678
      %v1905 = vmul.f32 %v1903, %v1678
      %v1906 = vadd.f32 %v1904, 1e-05
      %v1907 = vadd.f32 %v1905, 1e-05
      %v1908 = vrsqrt.pop %v1906
      %v1909 = vrsqrt.pop %v1907
      %v1910 = vmul.f32 %v1894, %v1908
      %v1911 = vmul.f32 %v1895, %v1909
      %v1913 = vlaneseq
      %v1914 = vshrl.u32 %v1913, 7
      %v1915 = vsub.s32 0, %v1914
      %v1916 = vrot.slane %v1884, %v1915
      %v1918 = vmul.f32 %v1910, %v1916
      %v1919 = vmul.f32 %v1911, %v1916
      %v1921 = vlaneseq
      %v1922 = vshrl.u32 %v1921, 7
      %v1923 = vsub.s32 0, %v1922
      %v1924 = vrot.slane %v1885, %v1923
      %v1926 = vadd.f32 %v1918, %v1924
      %v1927 = vadd.f32 %v1919, %v1924
      %v1928 = vmul.f32 %v1926, %v1718
      %v1929 = vmul.f32 %v1927, %v1723
      %1930 = vst.msk [vmem:[#allocation2] sm:$0xff] %vm1623, %v1928
      %1931 = vst.msk [vmem:[#allocation2 + $0x8] sm:$0xff] %vm1623, %v1929
      %p1932 = scmp.eq.s32.totalorder %s30, 1
      // Predicated region
      $region81: #{decoder_forward.2} parent=75 // pred_check
        %p1933 = pneg %p1932
      $region82: #{decoder_forward.2} parent=75 // pred_check_branch
        %1935 = sbr.rel (%p1933) target = $region84
      $region83: #{decoder_forward.2} parent=75 // pred_region
        %1936 = vst.msk [vmem:[%s657] sm:$0xff] %vm1623, %v1928
        %1937 = vst.msk [vmem:[%s657 + $0x8] sm:$0xff] %vm1623, %v1929
      $region84: #{decoder_forward.2} parent=75 // pred_fallthru
        _
      %p1938 = scmp.lt.s32.totalorder %s29, 1
      %s1939 = scalar_select %p1938, %s29, 1
      %s1940 = smul.addr %s1939, 2
      %s1941 = smul.addr %s1940, 8
      %s1942 = scalar_lea.vmem %s14, %s1941
      // Predicated region
      $region85: #{decoder_forward.2} parent=75 // pred_check
        %p1943 = pneg %p409
      $region86: #{decoder_forward.2} parent=75 // pred_check_branch
        %1945 = sbr.rel (%p1943) target = $region88
      $region87: #{decoder_forward.2} parent=75 // pred_region
        _
      $region88: #{decoder_forward.2} parent=75 // pred_fallthru
        _
    $region76: #{decoder_forward.2} parent=5 // pred_fallthru
      _
    %p1946 = scmp.le.s32.totalorder 2, %s20
    // Predicated region
    $region89: #{decoder_forward.2} parent=5 // pred_check
      %p1947 = pneg %p1946
    $region90: #{decoder_forward.2} parent=5 // pred_check_branch
      %1949 = sbr.rel (%p1947) target = $region92
    $region91: #{decoder_forward.2} parent=5 // pred_region
      %s1950 = ssub.s32 %s20, 2
      // Predicated region
      $region93: #{decoder_forward.2} parent=91 // pred_check
        %p1951 = pneg %p415
      $region94: #{decoder_forward.2} parent=91 // pred_check_branch
        %1953 = sbr.rel (%p1951) target = $region96
      $region95: #{decoder_forward.2} parent=91 // pred_region
        %p1954 = scmp.lt.s32.totalorder %s31, 1
        %s1955 = scalar_select %p1954, %s31, 1
        %s1956 = smul.addr %s1955, 2
        %s1957 = smul.addr %s1956, 8
        %s1958 = scalar_lea.vmem %s14, %s1957
      $region96: #{decoder_forward.2} parent=91 // pred_fallthru
        _
    $region92: #{decoder_forward.2} parent=5 // pred_fallthru
      _
  $region6: #{decoder_forward.2} parent=0 // loop_footer
    %s24 = sadd.s32 1, %s20
  $region7: #{decoder_forward.2} parent=0 // loop_footer_branch
    %19 = sbr.rel target = $region3
  $region8: #{decoder_forward.2} parent=0 // loop_exit
    _

</llo_original>
